<compile_context>
chip_gen: v6e
topology: v6e:2x2x1
jax: 0.10.0
libtpu: 0.0.40
codegen_flags: <defaults>
</compile_context>

<pallas_src>
import functools

import jax
import jax.numpy as jnp
from jax.experimental import pallas as pl
from jax.experimental.pallas import tpu as pltpu

LANE = 128
SUBLANE = 8


def _round_up(x, m):
    return ((x + m - 1) // m) * m


def _pad2(x, r, c):
    return jnp.pad(x, ((0, r - x.shape[0]), (0, c - x.shape[1])))


def _pad3(x, a, b, c):
    return jnp.pad(x, ((0, a - x.shape[0]), (0, b - x.shape[1]),
                       (0, c - x.shape[2])))


def _fit_rows(x, n):
    """Pad or slice the leading (node) axis of an activation to n rows."""
    if x.shape[0] == n:
        return x
    if x.shape[0] > n:
        return x[:n]
    return jnp.pad(x, ((0, n - x.shape[0]), (0, 0)))


def _pick_tile(n, max_tile, waste_frac=0.10):
    """Largest power-of-two multiple of 128 <= max_tile with bounded padding."""
    best = LANE
    t = LANE
    while t <= max_tile:
        waste = _round_up(n, t) - n
        if waste <= max(LANE, int(waste_frac * n)):
            best = t
        t *= 2
    return best


def _tpu_tile_config():
    """Generation-specific tile sizes / scoped-VMEM budget."""
    try:
        vmem_bytes = int(pltpu.get_tpu_info().vmem_capacity_bytes)
    except Exception:  # unknown / emulated target -> conservative (v7x) budget
        vmem_bytes = 64 * 1024 * 1024
    if vmem_bytes <= 64 * 1024 * 1024:
        # v7x-class: 64 MiB VMEM per TensorCore.
        return dict(tm=256, tk=2048, vmem_limit=48 * 1024 * 1024)
    # v5e/v6e-class: 128 MiB VMEM -> bigger tiles, bigger scoped-VMEM budget.
    return dict(tm=512, tk=4096, vmem_limit=100 * 1024 * 1024)


# -----------------------------------------------------------------------------
# Kernels
# -----------------------------------------------------------------------------
def _encode_kernel(e_ref, eb_ref, w_ref, b_ref, o_ref):
    # x = relu(node_embeddings + node_embeddings_bias) @ W_enc + b_enc
    x = jnp.maximum(e_ref[...] + eb_ref[...], 0.0).astype(jnp.bfloat16)
    o_ref[...] = (
        jnp.dot(x, w_ref[...], preferred_element_type=jnp.float32) + b_ref[...]
    ).astype(o_ref.dtype)


def _rgcn_kernel(a_ref, x_ref, w_ref, b_ref, inv_ref, o_ref, acc_ref, *,
                 out_relu):
    # Grid (i, k, r): one K-tile of the contraction, one relation.
    #   acc += (counts[r, i-tile, k-tile] @ X[k-tile]) @ W_r
    # f32 VMEM accumulator; degree scale + bias (+ ReLU) applied once at the
    # last (k, r) step, single lane-dense store.
    k = pl.program_id(1)
    r = pl.program_id(2)

    @pl.when((k == 0) & (r == 0))
    def _():
        acc_ref[...] = jnp.zeros_like(acc_ref)

    # int8 edge counts -> bf16 (exact for small counts), bf16 x bf16 MXU dots.
    ax = jnp.dot(a_ref[0].astype(jnp.bfloat16), x_ref[...],
                 preferred_element_type=jnp.float32)
    acc_ref[...] += jnp.dot(ax.astype(jnp.bfloat16), w_ref[0],
                            preferred_element_type=jnp.float32)

    @pl.when((k == pl.num_programs(1) - 1) & (r == pl.num_programs(2) - 1))
    def _():
        out = acc_ref[...] * inv_ref[...] + b_ref[...]
        if out_relu:  # inter-layer ReLU fused into the epilogue
            out = jnp.maximum(out, 0.0)
        o_ref[...] = out.astype(o_ref.dtype)


def _rgcn_decode_kernel(a_ref, x_ref, w_ref, b_ref, inv_ref, e_ref, wd_ref,
                        bd_ref, o_ref, acc_ref):
    # rgc2 with the decoding layer fused into the epilogue:
    #   out = node_emb + (inv_deg * sum_{r,k}(counts @ X) @ W_r + b) @ W_dec + b_dec
    k = pl.program_id(1)
    r = pl.program_id(2)

    @pl.when((k == 0) & (r == 0))
    def _():
        acc_ref[...] = jnp.zeros_like(acc_ref)

    ax = jnp.dot(a_ref[0].astype(jnp.bfloat16), x_ref[...],
                 preferred_element_type=jnp.float32)
    acc_ref[...] += jnp.dot(ax.astype(jnp.bfloat16), w_ref[0],
                            preferred_element_type=jnp.float32)

    @pl.when((k == pl.num_programs(1) - 1) & (r == pl.num_programs(2) - 1))
    def _():
        h = (acc_ref[...] * inv_ref[...] + b_ref[...]).astype(jnp.bfloat16)
        o_ref[...] = (
            e_ref[...]
            + jnp.dot(h, wd_ref[...], preferred_element_type=jnp.float32)
            + bd_ref[...]
        ).astype(o_ref.dtype)


# -----------------------------------------------------------------------------
# Pallas wrappers
# -----------------------------------------------------------------------------
def encode(node_emb, node_emb_bias, w_enc, b_enc, *, tm):
    n, d_in = node_emb.shape
    d_out = w_enc.shape[1]
    return pl.pallas_call(
        _encode_kernel,
        out_shape=jax.ShapeDtypeStruct((n, d_out), jnp.bfloat16),
        grid=(n // tm,),
        in_specs=[
            pl.BlockSpec((tm, d_in), lambda i: (i, 0)),
            pl.BlockSpec((1, d_in), lambda i: (0, 0)),
            pl.BlockSpec((d_in, d_out), lambda i: (0, 0)),
            pl.BlockSpec((1, d_out), lambda i: (0, 0)),
        ],
        out_specs=pl.BlockSpec((tm, d_out), lambda i: (i, 0)),
        compiler_params=pltpu.CompilerParams(
            dimension_semantics=("parallel",)),
    )(node_emb, node_emb_bias, w_enc, b_enc)


def rgcn_layer(adj, x, w, b, inv_deg, *, tm, tk, vmem_limit, out_relu,
               out_dtype):
    num_rel, n_rows, n_cols = adj.shape
    d_in = x.shape[1]
    d_out = w.shape[2]
    kernel = functools.partial(_rgcn_kernel, out_relu=out_relu)
    return pl.pallas_call(
        kernel,
        out_shape=jax.ShapeDtypeStruct((n_rows, d_out), out_dtype),
        grid=(n_rows // tm, n_cols // tk, num_rel),
        in_specs=[
            pl.BlockSpec((1, tm, tk), lambda i, k, r: (r, i, k)),   # int8 counts
            pl.BlockSpec((tk, d_in), lambda i, k, r: (k, 0)),       # bf16 X
            pl.BlockSpec((1, d_in, d_out), lambda i, k, r: (r, 0, 0)),
            pl.BlockSpec((1, d_out), lambda i, k, r: (0, 0)),
            pl.BlockSpec((tm, 1), lambda i, k, r: (i, 0)),          # f32 1/deg
        ],
        out_specs=pl.BlockSpec((tm, d_out), lambda i, k, r: (i, 0)),
        scratch_shapes=[pltpu.VMEM((tm, d_out), jnp.float32)],
        compiler_params=pltpu.CompilerParams(
            dimension_semantics=("parallel", "arbitrary", "arbitrary"),
            vmem_limit_bytes=vmem_limit),
    )(adj, x, w, b, inv_deg)


def rgcn_decode_layer(adj, x, w, b, inv_deg, node_emb, w_dec, b_dec, *, tm, tk,
                      vmem_limit):
    num_rel, n_rows, n_cols = adj.shape
    d_in = x.shape[1]
    d_mid = w.shape[2]
    d_out = w_dec.shape[1]
    return pl.pallas_call(
        _rgcn_decode_kernel,
        out_shape=jax.ShapeDtypeStruct((n_rows, d_out), jnp.float32),
        grid=(n_rows // tm, n_cols // tk, num_rel),
        in_specs=[
            pl.BlockSpec((1, tm, tk), lambda i, k, r: (r, i, k)),
            pl.BlockSpec((tk, d_in), lambda i, k, r: (k, 0)),
            pl.BlockSpec((1, d_in, d_mid), lambda i, k, r: (r, 0, 0)),
            pl.BlockSpec((1, d_mid), lambda i, k, r: (0, 0)),
            pl.BlockSpec((tm, 1), lambda i, k, r: (i, 0)),
            pl.BlockSpec((tm, d_out), lambda i, k, r: (i, 0)),      # node_emb
            pl.BlockSpec((d_mid, d_out), lambda i, k, r: (0, 0)),   # W_dec
            pl.BlockSpec((1, d_out), lambda i, k, r: (0, 0)),       # b_dec
        ],
        out_specs=pl.BlockSpec((tm, d_out), lambda i, k, r: (i, 0)),
        scratch_shapes=[pltpu.VMEM((tm, d_mid), jnp.float32)],
        compiler_params=pltpu.CompilerParams(
            dimension_semantics=("parallel", "arbitrary", "arbitrary"),
            vmem_limit_bytes=vmem_limit),
    )(adj, x, w, b, inv_deg, node_emb, w_dec, b_dec)


# -----------------------------------------------------------------------------
# Model glue (parameter setup, adjacency construction, padding, scoring)
# -----------------------------------------------------------------------------
def init_params(key, nnodes, nrel, nemb, nhid1, nhid2):
    num_rgcn_rel = 2 * nrel + 1
    ks = jax.random.split(key, 8)
    scale = 0.1
    return {
        "node_emb": scale * jax.random.normal(ks[0], (nnodes, nemb), jnp.float32),
        "node_emb_bias": jnp.zeros((1, nemb), jnp.float32),
        "w_enc": scale * jax.random.normal(ks[1], (nemb, nhid1), jnp.float32),
        "b_enc": jnp.zeros((1, nhid1), jnp.float32),
        "w_rgc1": scale * jax.random.normal(ks[2], (num_rgcn_rel, nemb, nhid1), jnp.float32),
        "b_rgc1": jnp.zeros((1, nhid1), jnp.float32),
        "w_rgc2": scale * jax.random.normal(ks[3], (num_rgcn_rel, nhid1, nhid2), jnp.float32),
        "b_rgc2": jnp.zeros((1, nhid2), jnp.float32),
        "w_dec": scale * jax.random.normal(ks[4], (nhid2, nemb), jnp.float32),
        "b_dec": jnp.zeros((1, nemb), jnp.float32),
        "relations": scale * jax.random.normal(ks[5], (nrel, nemb), jnp.float32),
    }


def build_adjacency(triples, nnodes, nrel):
    """Stacked edge counts (2*nrel+1, N, N) as int8 plus the exact f32 per-row
    reciprocal degree (sum over all relations) used for in-kernel normalisation."""
    num_rgcn_rel = 2 * nrel + 1
    s, p, o = triples[:, 0], triples[:, 1], triples[:, 2]
    adj = jnp.zeros((num_rgcn_rel, nnodes, nnodes), jnp.int32)
    adj = adj.at[p, o, s].add(1)               # forward edges: message s -> o
    adj = adj.at[p + nrel, s, o].add(1)        # inverse edges
    diag = jnp.arange(nnodes)
    adj = adj.at[2 * nrel, diag, diag].add(1)  # self-loops
    deg = jnp.sum(adj, axis=(0, 2)).astype(jnp.float32)        # (N,)
    inv_deg = 1.0 / jnp.maximum(deg, 1.0)
    counts = jnp.clip(adj, 0, 127).astype(jnp.int8)
    return counts, inv_deg


def forward(params, adj_counts, inv_deg, triples, decoder_l2=0.01):
    nnodes, nemb = params["node_emb"].shape
    nhid1 = params["w_rgc1"].shape[2]
    nhid2 = params["w_rgc2"].shape[2]
    num_rel = adj_counts.shape[0]
    if params["w_rgc1"].shape[1] != nhid1:
        # Same implicit requirement as the torch module (encoder output width
        # must equal rgc1's in_features): nemb == hidden1_size.
        raise ValueError("CompressionRelationPredictor requires nemb == nhid1")

    cfg = _tpu_tile_config()

    # ---- pad to TPU-friendly shapes ----------------------------------------
    nemb_p = _round_up(nemb, LANE)
    nhid1_p = _round_up(nhid1, LANE)
    nhid2_p = _round_up(nhid2, LANE)

    tm = _pick_tile(nnodes, cfg["tm"])
    # v7x megacore: keep >= 2 row tiles whenever the padded node count allows.
    while tm > LANE and _round_up(nnodes, tm) // tm < 2:
        tm //= 2
    tk = _pick_tile(nnodes, cfg["tk"])
    n_rows_p = _round_up(nnodes, tm)        # adjacency rows / output rows
    n_cols_p = _round_up(nnodes, tk)        # adjacency cols / X rows
    n_act_p = max(n_rows_p, n_cols_p)
    tm_enc = min(tm, tk)                    # divides n_cols_p (both pow2*128)
    vmem_limit = cfg["vmem_limit"]

    bf16 = jnp.bfloat16
    node_emb_p = _pad2(params["node_emb"], n_act_p, nemb_p)
    node_emb_bias_p = _pad2(params["node_emb_bias"], 1, nemb_p)
    w_enc_p = _pad2(params["w_enc"], nemb_p, nhid1_p).astype(bf16)
    b_enc_p = _pad2(params["b_enc"], 1, nhid1_p)
    # rgc1 consumes the encoding-layer output (width nhid1): nemb == nhid1.
    w_rgc1_p = _pad3(params["w_rgc1"], num_rel, nhid1_p, nhid1_p).astype(bf16)
    b_rgc1_p = _pad2(params["b_rgc1"], 1, nhid1_p)
    w_rgc2_p = _pad3(params["w_rgc2"], num_rel, nhid1_p, nhid2_p).astype(bf16)
    b_rgc2_p = _pad2(params["b_rgc2"], 1, nhid2_p)
    w_dec_p = _pad2(params["w_dec"], nhid2_p, nemb_p).astype(bf16)
    b_dec_p = _pad2(params["b_dec"], 1, nemb_p)
    # int8 counts: rows padded to TM only, columns padded to TK only.
    adj_p = jnp.pad(adj_counts, ((0, 0), (0, n_rows_p - nnodes),
                                 (0, n_cols_p - nnodes)))
    inv_p = _pad2(inv_deg.astype(jnp.float32).reshape(-1, 1), n_rows_p, 1)

    # x = encoding_layer(relu(node_embeddings + bias))     -> bf16 (n_cols_p, nhid1_p)
    x = encode(node_emb_p[:n_cols_p], node_emb_bias_p, w_enc_p, b_enc_p,
               tm=tm_enc)
    # x = relu(rgc1(graph, x))   (normalisation + bias + ReLU in the epilogue)
    x = rgcn_layer(adj_p, x, w_rgc1_p, b_rgc1_p, inv_p, tm=tm, tk=tk,
                   vmem_limit=vmem_limit, out_relu=True, out_dtype=bf16)
    x = _fit_rows(x, n_cols_p)
    # x = node_embeddings + decoding_layer(rgc2(graph, x))   (decode fused)
    x = rgcn_decode_layer(adj_p, x, w_rgc2_p, b_rgc2_p, inv_p,
                          node_emb_p[:n_rows_p], w_dec_p, b_dec_p,
                          tm=tm, tk=tk, vmem_limit=vmem_limit)
    x = x[:nnodes, :nemb]  # strip padding before scoring

    # DistMult scoring: gathers + one multiply-reduce — left to XLA per review.
    s_emb = jnp.take(x, triples[:, 0], axis=0)
    r_emb = jnp.take(params["relations"], triples[:, 1], axis=0)
    o_emb = jnp.take(x, triples[:, 2], axis=0)
    scores = jnp.sum(s_emb * r_emb * o_emb, axis=-1)

    # compute_penalty: standard l2 path (relations.pow(2).sum()).
    # TODO(synk): schlichtkrull-l2 penalty variant not implemented.
    penalty = jnp.where(decoder_l2 == 0.0, 0.0,
                        jnp.sum(params["relations"] ** 2))
    return scores, penalty


# -----------------------------------------------------------------------------
if __name__ == "__main__":
    NNODES, NREL = 64, 4
    NEMB = NHID1 = NHID2 = 32   # bottleneck sizes equal so the original
    # module's (nemb -> nhid -> nemb) data flow is shape-consistent.
    NUM_EDGES, NUM_TRIPLES = 96, 12

    key = jax.random.PRNGKey(0)
    k_param, k_edges, k_trip = jax.random.split(key, 3)

    params = init_params(k_param, NNODES, NREL, NEMB, NHID1, NHID2)

    ke = jax.random.split(k_edges, 3)
    graph_triples = jnp.stack(
        [
            jax.random.randint(ke[0], (NUM_EDGES,), 0, NNODES, jnp.int32),
            jax.random.randint(ke[1], (NUM_EDGES,), 0, NREL, jnp.int32),
            jax.random.randint(ke[2], (NUM_EDGES,), 0, NNODES, jnp.int32),
        ],
        axis=1,
    )
    kt = jax.random.split(k_trip, 3)
    eval_triples = jnp.stack(
        [
            jax.random.randint(kt[0], (NUM_TRIPLES,), 0, NNODES, jnp.int32),
            jax.random.randint(kt[1], (NUM_TRIPLES,), 0, NREL, jnp.int32),
            jax.random.randint(kt[2], (NUM_TRIPLES,), 0, NNODES, jnp.int32),
        ],
        axis=1,
    )

    adj_counts, inv_deg = build_adjacency(graph_triples, NNODES, NREL)

    scores, penalty = jax.jit(forward)(params, adj_counts, inv_deg, eval_triples)
    jax.block_until_ready((scores, penalty))
    assert scores.shape == (NUM_TRIPLES,)
    assert bool(jnp.all(jnp.isfinite(scores)))
    print("KERNEL_OK")
</pallas_src>

<mosaic_0001>
module attributes {stable_mosaic.version = 11 : i64} {
  func.func @_encode_kernel(%arg0: i32, %arg1: memref<128x128xf32, #tpu.memory_space<vmem>>, %arg2: memref<1x128xf32, #tpu.memory_space<vmem>>, %arg3: memref<128x128xbf16, #tpu.memory_space<vmem>>, %arg4: memref<1x128xf32, #tpu.memory_space<vmem>>, %arg5: memref<128x128xbf16, #tpu.memory_space<vmem>>) attributes {dimension_semantics = [#tpu.dimension_semantics<parallel>], iteration_bounds = array<i64: 1>, scalar_prefetch = 0 : i64, scratch_operands = 0 : i64, tpu.core_type = #tpu.core_type<tc>, window_params = [{transform_indices = @transform_0, window_bounds = array<i64: 128, 128>}, {pipeline_mode = #tpu.pipeline_mode<synchronous>, transform_indices = @transform_1, window_bounds = array<i64: 1, 128>}, {pipeline_mode = #tpu.pipeline_mode<synchronous>, transform_indices = @transform_2, window_bounds = array<i64: 128, 128>}, {pipeline_mode = #tpu.pipeline_mode<synchronous>, transform_indices = @transform_3, window_bounds = array<i64: 1, 128>}, {transform_indices = @transform_4, window_bounds = array<i64: 128, 128>}]} {
    %c0 = arith.constant 0 : index
    %c0_0 = arith.constant 0 : index
    %0 = vector.load %arg1[%c0, %c0_0] : memref<128x128xf32, #tpu.memory_space<vmem>>, vector<128x128xf32>
    %c0_1 = arith.constant 0 : index
    %c0_2 = arith.constant 0 : index
    %1 = vector.load %arg2[%c0_1, %c0_2] : memref<1x128xf32, #tpu.memory_space<vmem>>, vector<1x128xf32>
    %2 = vector.broadcast %1 : vector<1x128xf32> to vector<128x128xf32>
    %3 = arith.addf %0, %2 : vector<128x128xf32>
    %cst = arith.constant 0.000000e+00 : f32
    %4 = vector.broadcast %cst : f32 to vector<128x128xf32>
    %5 = arith.maximumf %3, %4 : vector<128x128xf32>
    %6 = arith.truncf %5 : vector<128x128xf32> to vector<128x128xbf16>
    %c0_3 = arith.constant 0 : index
    %c0_4 = arith.constant 0 : index
    %7 = vector.load %arg3[%c0_3, %c0_4] : memref<128x128xbf16, #tpu.memory_space<vmem>>, vector<128x128xbf16>
    %cst_5 = arith.constant dense<0.000000e+00> : vector<128x128xf32>
    %8 = tpu.matmul %6, %7, %cst_5 {dimension_numbers = #tpu.dot_dimension_numbers<[1], [0], [0], [1], [0, 0, 1, 1], [], []>} : vector<128x128xbf16>, vector<128x128xbf16>, vector<128x128xf32> -> vector<128x128xf32>
    %c0_6 = arith.constant 0 : index
    %c0_7 = arith.constant 0 : index
    %9 = vector.load %arg4[%c0_6, %c0_7] : memref<1x128xf32, #tpu.memory_space<vmem>>, vector<1x128xf32>
    %10 = vector.broadcast %9 : vector<1x128xf32> to vector<128x128xf32>
    %11 = arith.addf %8, %10 : vector<128x128xf32>
    %12 = arith.truncf %11 : vector<128x128xf32> to vector<128x128xbf16>
    %c0_8 = arith.constant 0 : index
    %c0_9 = arith.constant 0 : index
    %13 = vector.load %arg5[%c0_8, %c0_9] : memref<128x128xbf16, #tpu.memory_space<vmem>>, vector<128x128xbf16>
    tpu.vector_store %arg5[%c0_8, %c0_9], %12 {strides = array<i32>} : memref<128x128xbf16, #tpu.memory_space<vmem>>, vector<128x128xbf16>,
    return
  }
  func.func @transform_0(%arg0: i32) -> (i32, i32) {
    %c0_i32 = arith.constant 0 : i32
    %c0_i32_0 = arith.constant 0 : i32
    return %arg0, %c0_i32 : i32, i32
  }
  func.func @transform_1(%arg0: i32) -> (i32, i32) {
    %c0_i32 = arith.constant 0 : i32
    %c0_i32_0 = arith.constant 0 : i32
    %c0_i32_1 = arith.constant 0 : i32
    return %c0_i32, %c0_i32_0 : i32, i32
  }
  func.func @transform_2(%arg0: i32) -> (i32, i32) {
    %c0_i32 = arith.constant 0 : i32
    %c0_i32_0 = arith.constant 0 : i32
    %c0_i32_1 = arith.constant 0 : i32
    return %c0_i32, %c0_i32_0 : i32, i32
  }
  func.func @transform_3(%arg0: i32) -> (i32, i32) {
    %c0_i32 = arith.constant 0 : i32
    %c0_i32_0 = arith.constant 0 : i32
    %c0_i32_1 = arith.constant 0 : i32
    return %c0_i32, %c0_i32_0 : i32, i32
  }
  func.func @transform_4(%arg0: i32) -> (i32, i32) {
    %c0_i32 = arith.constant 0 : i32
    %c0_i32_0 = arith.constant 0 : i32
    return %arg0, %c0_i32 : i32, i32
  }
}

module attributes {stable_mosaic.version = 11 : i64} {
  func.func @_rgcn_kernel(%arg0: i32, %arg1: i32, %arg2: i32, %arg3: memref<1x128x128xi8, #tpu.memory_space<vmem>>, %arg4: memref<128x128xbf16, #tpu.memory_space<vmem>>, %arg5: memref<1x128x128xbf16, #tpu.memory_space<vmem>>, %arg6: memref<1x128xf32, #tpu.memory_space<vmem>>, %arg7: memref<128x1xf32, #tpu.memory_space<vmem>>, %arg8: memref<128x128xbf16, #tpu.memory_space<vmem>>, %arg9: memref<128x128xf32, #tpu.memory_space<vmem>>) attributes {dimension_semantics = [#tpu.dimension_semantics<parallel>, #tpu.dimension_semantics<arbitrary>, #tpu.dimension_semantics<arbitrary>], iteration_bounds = array<i64: 1, 1, 9>, scalar_prefetch = 0 : i64, scratch_operands = 1 : i64, tpu.core_type = #tpu.core_type<tc>, window_params = [{transform_indices = @transform_0, window_bounds = array<i64: 1, 128, 128>}, {transform_indices = @transform_1, window_bounds = array<i64: 128, 128>}, {transform_indices = @transform_2, window_bounds = array<i64: 1, 128, 128>}, {pipeline_mode = #tpu.pipeline_mode<synchronous>, transform_indices = @transform_3, window_bounds = array<i64: 1, 128>}, {transform_indices = @transform_4, window_bounds = array<i64: 128, 1>}, {transform_indices = @transform_5, window_bounds = array<i64: 128, 128>}]} {
    %c0_i32 = arith.constant 0 : i32
    %0 = arith.cmpi eq, %arg1, %c0_i32 : i32
    %c0_i32_0 = arith.constant 0 : i32
    %1 = arith.cmpi eq, %arg2, %c0_i32_0 : i32
    %2 = arith.andi %0, %1 : i1
    %3 = arith.extui %2 : i1 to i32
    %c0_i32_1 = arith.constant 0 : i32
    %4 = arith.cmpi ne, %3, %c0_i32_1 : i32
    scf.if %4 {
      %cst_16 = arith.constant 0.000000e+00 : f32
      %22 = vector.broadcast %cst_16 : f32 to vector<128x128xf32>
      %c0_17 = arith.constant 0 : index
      %c0_18 = arith.constant 0 : index
      %23 = vector.load %arg9[%c0_17, %c0_18] : memref<128x128xf32, #tpu.memory_space<vmem>>, vector<128x128xf32>
      tpu.vector_store %arg9[%c0_17, %c0_18], %22 {strides = array<i32>} : memref<128x128xf32, #tpu.memory_space<vmem>>, vector<128x128xf32>,
    } else {
    }
    %c0 = arith.constant 0 : index
    %c0_2 = arith.constant 0 : index
    %c0_3 = arith.constant 0 : index
    %5 = vector.load %arg3[%c0, %c0_2, %c0_3] : memref<1x128x128xi8, #tpu.memory_space<vmem>>, vector<1x128x128xi8>
    %6 = vector.shape_cast %5 : vector<1x128x128xi8> to vector<128x128xi8>
    %7 = arith.sitofp %6 : vector<128x128xi8> to vector<128x128xbf16>
    %c0_4 = arith.constant 0 : index
    %c0_5 = arith.constant 0 : index
    %8 = vector.load %arg4[%c0_4, %c0_5] : memref<128x128xbf16, #tpu.memory_space<vmem>>, vector<128x128xbf16>
    %cst = arith.constant dense<0.000000e+00> : vector<128x128xf32>
    %9 = tpu.matmul %7, %8, %cst {dimension_numbers = #tpu.dot_dimension_numbers<[1], [0], [0], [1], [0, 0, 1, 1], [], []>} : vector<128x128xbf16>, vector<128x128xbf16>, vector<128x128xf32> -> vector<128x128xf32>
    %c0_6 = arith.constant 0 : index
    %c0_7 = arith.constant 0 : index
    %10 = vector.load %arg9[%c0_6, %c0_7] : memref<128x128xf32, #tpu.memory_space<vmem>>, vector<128x128xf32>
    %11 = arith.truncf %9 : vector<128x128xf32> to vector<128x128xbf16>
    %c0_8 = arith.constant 0 : index
    %c0_9 = arith.constant 0 : index
    %c0_10 = arith.constant 0 : index
    %12 = vector.load %arg5[%c0_8, %c0_9, %c0_10] : memref<1x128x128xbf16, #tpu.memory_space<vmem>>, vector<1x128x128xbf16>
    %13 = vector.shape_cast %12 : vector<1x128x128xbf16> to vector<128x128xbf16>
    %cst_11 = arith.constant dense<0.000000e+00> : vector<128x128xf32>
    %14 = tpu.matmul %11, %13, %cst_11 {dimension_numbers = #tpu.dot_dimension_numbers<[1], [0], [0], [1], [0, 0, 1, 1], [], []>} : vector<128x128xbf16>, vector<128x128xbf16>, vector<128x128xf32> -> vector<128x128xf32>
    %15 = arith.addf %10, %14 : vector<128x128xf32>
    %c0_12 = arith.constant 0 : index
    %c0_13 = arith.constant 0 : index
    %16 = vector.load %arg9[%c0_12, %c0_13] : memref<128x128xf32, #tpu.memory_space<vmem>>, vector<128x128xf32>
    tpu.vector_store %arg9[%c0_12, %c0_13], %15 {strides = array<i32>} : memref<128x128xf32, #tpu.memory_space<vmem>>, vector<128x128xf32>,
    %c0_i32_14 = arith.constant 0 : i32
    %17 = arith.cmpi eq, %arg1, %c0_i32_14 : i32
    %c8_i32 = arith.constant 8 : i32
    %18 = arith.cmpi eq, %arg2, %c8_i32 : i32
    %19 = arith.andi %17, %18 : i1
    %20 = arith.extui %19 : i1 to i32
    %c0_i32_15 = arith.constant 0 : i32
    %21 = arith.cmpi ne, %20, %c0_i32_15 : i32
    scf.if %21 {
      %c0_16 = arith.constant 0 : index
      %c0_17 = arith.constant 0 : index
      %22 = vector.load %arg9[%c0_16, %c0_17] : memref<128x128xf32, #tpu.memory_space<vmem>>, vector<128x128xf32>
      %c0_18 = arith.constant 0 : index
      %c0_19 = arith.constant 0 : index
      %23 = vector.load %arg7[%c0_18, %c0_19] : memref<128x1xf32, #tpu.memory_space<vmem>>, vector<128x1xf32>
      %24 = vector.broadcast %23 : vector<128x1xf32> to vector<128x128xf32>
      %25 = arith.mulf %22, %24 : vector<128x128xf32>
      %c0_20 = arith.constant 0 : index
      %c0_21 = arith.constant 0 : index
      %26 = vector.load %arg6[%c0_20, %c0_21] : memref<1x128xf32, #tpu.memory_space<vmem>>, vector<1x128xf32>
      %27 = vector.broadcast %26 : vector<1x128xf32> to vector<128x128xf32>
      %28 = arith.addf %25, %27 : vector<128x128xf32>
      %cst_22 = arith.constant 0.000000e+00 : f32
      %29 = vector.broadcast %cst_22 : f32 to vector<128x128xf32>
      %30 = arith.maximumf %28, %29 : vector<128x128xf32>
      %31 = arith.truncf %30 : vector<128x128xf32> to vector<128x128xbf16>
      %c0_23 = arith.constant 0 : index
      %c0_24 = arith.constant 0 : index
      %32 = vector.load %arg8[%c0_23, %c0_24] : memref<128x128xbf16, #tpu.memory_space<vmem>>, vector<128x128xbf16>
      tpu.vector_store %arg8[%c0_23, %c0_24], %31 {strides = array<i32>} : memref<128x128xbf16, #tpu.memory_space<vmem>>, vector<128x128xbf16>,
    } else {
    }
    return
  }
  func.func @transform_0(%arg0: i32, %arg1: i32, %arg2: i32) -> (i32, i32, i32) {
    %c0_i32 = arith.constant 0 : i32
    return %arg2, %arg0, %arg1 : i32, i32, i32
  }
  func.func @transform_1(%arg0: i32, %arg1: i32, %arg2: i32) -> (i32, i32) {
    %c0_i32 = arith.constant 0 : i32
    %c0_i32_0 = arith.constant 0 : i32
    return %arg1, %c0_i32 : i32, i32
  }
  func.func @transform_2(%arg0: i32, %arg1: i32, %arg2: i32) -> (i32, i32, i32) {
    %c0_i32 = arith.constant 0 : i32
    %c0_i32_0 = arith.constant 0 : i32
    %c0_i32_1 = arith.constant 0 : i32
    return %arg2, %c0_i32, %c0_i32_0 : i32, i32, i32
  }
  func.func @transform_3(%arg0: i32, %arg1: i32, %arg2: i32) -> (i32, i32) {
    %c0_i32 = arith.constant 0 : i32
    %c0_i32_0 = arith.constant 0 : i32
    %c0_i32_1 = arith.constant 0 : i32
    return %c0_i32, %c0_i32_0 : i32, i32
  }
  func.func @transform_4(%arg0: i32, %arg1: i32, %arg2: i32) -> (i32, i32) {
    %c0_i32 = arith.constant 0 : i32
    %c0_i32_0 = arith.constant 0 : i32
    return %arg0, %c0_i32 : i32, i32
  }
  func.func @transform_5(%arg0: i32, %arg1: i32, %arg2: i32) -> (i32, i32) {
    %c0_i32 = arith.constant 0 : i32
    %c0_i32_0 = arith.constant 0 : i32
    return %arg0, %c0_i32 : i32, i32
  }
}

module attributes {stable_mosaic.version = 11 : i64} {
  func.func @_rgcn_decode_kernel(%arg0: i32, %arg1: i32, %arg2: i32, %arg3: memref<1x128x128xi8, #tpu.memory_space<vmem>>, %arg4: memref<128x128xbf16, #tpu.memory_space<vmem>>, %arg5: memref<1x128x128xbf16, #tpu.memory_space<vmem>>, %arg6: memref<1x128xf32, #tpu.memory_space<vmem>>, %arg7: memref<128x1xf32, #tpu.memory_space<vmem>>, %arg8: memref<128x128xf32, #tpu.memory_space<vmem>>, %arg9: memref<128x128xbf16, #tpu.memory_space<vmem>>, %arg10: memref<1x128xf32, #tpu.memory_space<vmem>>, %arg11: memref<128x128xf32, #tpu.memory_space<vmem>>, %arg12: memref<128x128xf32, #tpu.memory_space<vmem>>) attributes {dimension_semantics = [#tpu.dimension_semantics<parallel>, #tpu.dimension_semantics<arbitrary>, #tpu.dimension_semantics<arbitrary>], iteration_bounds = array<i64: 1, 1, 9>, scalar_prefetch = 0 : i64, scratch_operands = 1 : i64, tpu.core_type = #tpu.core_type<tc>, window_params = [{transform_indices = @transform_0, window_bounds = array<i64: 1, 128, 128>}, {transform_indices = @transform_1, window_bounds = array<i64: 128, 128>}, {transform_indices = @transform_2, window_bounds = array<i64: 1, 128, 128>}, {pipeline_mode = #tpu.pipeline_mode<synchronous>, transform_indices = @transform_3, window_bounds = array<i64: 1, 128>}, {transform_indices = @transform_4, window_bounds = array<i64: 128, 1>}, {transform_indices = @transform_5, window_bounds = array<i64: 128, 128>}, {pipeline_mode = #tpu.pipeline_mode<synchronous>, transform_indices = @transform_6, window_bounds = array<i64: 128, 128>}, {pipeline_mode = #tpu.pipeline_mode<synchronous>, transform_indices = @transform_7, window_bounds = array<i64: 1, 128>}, {transform_indices = @transform_8, window_bounds = array<i64: 128, 128>}]} {
    %c0_i32 = arith.constant 0 : i32
    %0 = arith.cmpi eq, %arg1, %c0_i32 : i32
    %c0_i32_0 = arith.constant 0 : i32
    %1 = arith.cmpi eq, %arg2, %c0_i32_0 : i32
    %2 = arith.andi %0, %1 : i1
    %3 = arith.extui %2 : i1 to i32
    %c0_i32_1 = arith.constant 0 : i32
    %4 = arith.cmpi ne, %3, %c0_i32_1 : i32
    scf.if %4 {
      %cst_16 = arith.constant 0.000000e+00 : f32
      %22 = vector.broadcast %cst_16 : f32 to vector<128x128xf32>
      %c0_17 = arith.constant 0 : index
      %c0_18 = arith.constant 0 : index
      %23 = vector.load %arg12[%c0_17, %c0_18] : memref<128x128xf32, #tpu.memory_space<vmem>>, vector<128x128xf32>
      tpu.vector_store %arg12[%c0_17, %c0_18], %22 {strides = array<i32>} : memref<128x128xf32, #tpu.memory_space<vmem>>, vector<128x128xf32>,
    } else {
    }
    %c0 = arith.constant 0 : index
    %c0_2 = arith.constant 0 : index
    %c0_3 = arith.constant 0 : index
    %5 = vector.load %arg3[%c0, %c0_2, %c0_3] : memref<1x128x128xi8, #tpu.memory_space<vmem>>, vector<1x128x128xi8>
    %6 = vector.shape_cast %5 : vector<1x128x128xi8> to vector<128x128xi8>
    %7 = arith.sitofp %6 : vector<128x128xi8> to vector<128x128xbf16>
    %c0_4 = arith.constant 0 : index
    %c0_5 = arith.constant 0 : index
    %8 = vector.load %arg4[%c0_4, %c0_5] : memref<128x128xbf16, #tpu.memory_space<vmem>>, vector<128x128xbf16>
    %cst = arith.constant dense<0.000000e+00> : vector<128x128xf32>
    %9 = tpu.matmul %7, %8, %cst {dimension_numbers = #tpu.dot_dimension_numbers<[1], [0], [0], [1], [0, 0, 1, 1], [], []>} : vector<128x128xbf16>, vector<128x128xbf16>, vector<128x128xf32> -> vector<128x128xf32>
    %c0_6 = arith.constant 0 : index
    %c0_7 = arith.constant 0 : index
    %10 = vector.load %arg12[%c0_6, %c0_7] : memref<128x128xf32, #tpu.memory_space<vmem>>, vector<128x128xf32>
    %11 = arith.truncf %9 : vector<128x128xf32> to vector<128x128xbf16>
    %c0_8 = arith.constant 0 : index
    %c0_9 = arith.constant 0 : index
    %c0_10 = arith.constant 0 : index
    %12 = vector.load %arg5[%c0_8, %c0_9, %c0_10] : memref<1x128x128xbf16, #tpu.memory_space<vmem>>, vector<1x128x128xbf16>
    %13 = vector.shape_cast %12 : vector<1x128x128xbf16> to vector<128x128xbf16>
    %cst_11 = arith.constant dense<0.000000e+00> : vector<128x128xf32>
    %14 = tpu.matmul %11, %13, %cst_11 {dimension_numbers = #tpu.dot_dimension_numbers<[1], [0], [0], [1], [0, 0, 1, 1], [], []>} : vector<128x128xbf16>, vector<128x128xbf16>, vector<128x128xf32> -> vector<128x128xf32>
    %15 = arith.addf %10, %14 : vector<128x128xf32>
    %c0_12 = arith.constant 0 : index
    %c0_13 = arith.constant 0 : index
    %16 = vector.load %arg12[%c0_12, %c0_13] : memref<128x128xf32, #tpu.memory_space<vmem>>, vector<128x128xf32>
    tpu.vector_store %arg12[%c0_12, %c0_13], %15 {strides = array<i32>} : memref<128x128xf32, #tpu.memory_space<vmem>>, vector<128x128xf32>,
    %c0_i32_14 = arith.constant 0 : i32
    %17 = arith.cmpi eq, %arg1, %c0_i32_14 : i32
    %c8_i32 = arith.constant 8 : i32
    %18 = arith.cmpi eq, %arg2, %c8_i32 : i32
    %19 = arith.andi %17, %18 : i1
    %20 = arith.extui %19 : i1 to i32
    %c0_i32_15 = arith.constant 0 : i32
    %21 = arith.cmpi ne, %20, %c0_i32_15 : i32
    scf.if %21 {
      %c0_16 = arith.constant 0 : index
      %c0_17 = arith.constant 0 : index
      %22 = vector.load %arg12[%c0_16, %c0_17] : memref<128x128xf32, #tpu.memory_space<vmem>>, vector<128x128xf32>
      %c0_18 = arith.constant 0 : index
      %c0_19 = arith.constant 0 : index
      %23 = vector.load %arg7[%c0_18, %c0_19] : memref<128x1xf32, #tpu.memory_space<vmem>>, vector<128x1xf32>
      %24 = vector.broadcast %23 : vector<128x1xf32> to vector<128x128xf32>
      %25 = arith.mulf %22, %24 : vector<128x128xf32>
      %c0_20 = arith.constant 0 : index
      %c0_21 = arith.constant 0 : index
      %26 = vector.load %arg6[%c0_20, %c0_21] : memref<1x128xf32, #tpu.memory_space<vmem>>, vector<1x128xf32>
      %27 = vector.broadcast %26 : vector<1x128xf32> to vector<128x128xf32>
      %28 = arith.addf %25, %27 : vector<128x128xf32>
      %29 = arith.truncf %28 : vector<128x128xf32> to vector<128x128xbf16>
      %c0_22 = arith.constant 0 : index
      %c0_23 = arith.constant 0 : index
      %30 = vector.load %arg8[%c0_22, %c0_23] : memref<128x128xf32, #tpu.memory_space<vmem>>, vector<128x128xf32>
      %c0_24 = arith.constant 0 : index
      %c0_25 = arith.constant 0 : index
      %31 = vector.load %arg9[%c0_24, %c0_25] : memref<128x128xbf16, #tpu.memory_space<vmem>>, vector<128x128xbf16>
      %cst_26 = arith.constant dense<0.000000e+00> : vector<128x128xf32>
      %32 = tpu.matmul %29, %31, %cst_26 {dimension_numbers = #tpu.dot_dimension_numbers<[1], [0], [0], [1], [0, 0, 1, 1], [], []>} : vector<128x128xbf16>, vector<128x128xbf16>, vector<128x128xf32> -> vector<128x128xf32>
      %33 = arith.addf %30, %32 : vector<128x128xf32>
      %c0_27 = arith.constant 0 : index
      %c0_28 = arith.constant 0 : index
      %34 = vector.load %arg10[%c0_27, %c0_28] : memref<1x128xf32, #tpu.memory_space<vmem>>, vector<1x128xf32>
      %35 = vector.broadcast %34 : vector<1x128xf32> to vector<128x128xf32>
      %36 = arith.addf %33, %35 : vector<128x128xf32>
      %c0_29 = arith.constant 0 : index
      %c0_30 = arith.constant 0 : index
      %37 = vector.load %arg11[%c0_29, %c0_30] : memref<128x128xf32, #tpu.memory_space<vmem>>, vector<128x128xf32>
      tpu.vector_store %arg11[%c0_29, %c0_30], %36 {strides = array<i32>} : memref<128x128xf32, #tpu.memory_space<vmem>>, vector<128x128xf32>,
    } else {
    }
    return
  }
  func.func @transform_0(%arg0: i32, %arg1: i32, %arg2: i32) -> (i32, i32, i32) {
    %c0_i32 = arith.constant 0 : i32
    return %arg2, %arg0, %arg1 : i32, i32, i32
  }
  func.func @transform_1(%arg0: i32, %arg1: i32, %arg2: i32) -> (i32, i32) {
    %c0_i32 = arith.constant 0 : i32
    %c0_i32_0 = arith.constant 0 : i32
    return %arg1, %c0_i32 : i32, i32
  }
  func.func @transform_2(%arg0: i32, %arg1: i32, %arg2: i32) -> (i32, i32, i32) {
    %c0_i32 = arith.constant 0 : i32
    %c0_i32_0 = arith.constant 0 : i32
    %c0_i32_1 = arith.constant 0 : i32
    return %arg2, %c0_i32, %c0_i32_0 : i32, i32, i32
  }
  func.func @transform_3(%arg0: i32, %arg1: i32, %arg2: i32) -> (i32, i32) {
    %c0_i32 = arith.constant 0 : i32
    %c0_i32_0 = arith.constant 0 : i32
    %c0_i32_1 = arith.constant 0 : i32
    return %c0_i32, %c0_i32_0 : i32, i32
  }
  func.func @transform_4(%arg0: i32, %arg1: i32, %arg2: i32) -> (i32, i32) {
    %c0_i32 = arith.constant 0 : i32
    %c0_i32_0 = arith.constant 0 : i32
    return %arg0, %c0_i32 : i32, i32
  }
  func.func @transform_5(%arg0: i32, %arg1: i32, %arg2: i32) -> (i32, i32) {
    %c0_i32 = arith.constant 0 : i32
    %c0_i32_0 = arith.constant 0 : i32
    return %arg0, %c0_i32 : i32, i32
  }
  func.func @transform_6(%arg0: i32, %arg1: i32, %arg2: i32) -> (i32, i32) {
    %c0_i32 = arith.constant 0 : i32
    %c0_i32_0 = arith.constant 0 : i32
    %c0_i32_1 = arith.constant 0 : i32
    return %c0_i32, %c0_i32_0 : i32, i32
  }
  func.func @transform_7(%arg0: i32, %arg1: i32, %arg2: i32) -> (i32, i32) {
    %c0_i32 = arith.constant 0 : i32
    %c0_i32_0 = arith.constant 0 : i32
    %c0_i32_1 = arith.constant 0 : i32
    return %c0_i32, %c0_i32_0 : i32, i32
  }
  func.func @transform_8(%arg0: i32, %arg1: i32, %arg2: i32) -> (i32, i32) {
    %c0_i32 = arith.constant 0 : i32
    %c0_i32_0 = arith.constant 0 : i32
    return %arg0, %c0_i32 : i32, i32
  }
}

</mosaic_0001>

<llo_original>
// kernel: forward.3
$region0: #{forward.3}
  #allocation0 [shape = 'u32[]', space=smem, size = 0x4, offset = 0x4, fixed_abs, tag = 'smem constant byte address 0x4 - core index']
  #allocation1 [shape = 'u32[144,128]{1,0:T(1,128)}', space=vmem, size = 0x12000, scoped, tag = 'internal scratch']
  %s0 = inlined_call_operand.vmem [shape: f32[128,128], index: 0, kind: input, shape index: {}]
  %s1 = inlined_call_operand.vmem [shape: f32[1,128], index: 1, kind: input, shape index: {}]
  %s2 = inlined_call_operand.vmem [shape: bf16[128,128], index: 2, kind: input, shape index: {}]
  %s3 = inlined_call_operand.vmem [shape: f32[1,128], index: 3, kind: input, shape index: {}]
  %s4 = inlined_call_operand.vmem [shape: bf16[128,128], index: 4, kind: output, shape index: {}]
  %s5 = sld [smem:[#allocation0]]
  $region26: #{forward.3} parent=0
    _
  %s7 = ssub.s32 1, %s5
  %s8 = scalar_select 0, %s7, %s5
  // Predicated region
  $region2: #{forward.3} parent=0 // pred_check
    _
  $region3: #{forward.3} parent=0 // pred_check_branch
    %10 = sbr.rel (0) target = $region5
  $region4: #{forward.3} parent=0 // pred_region
    _
  $region5: #{forward.3} parent=0 // pred_fallthru
    _
  // Predicated region
  $region6: #{forward.3} parent=0 // pred_check
    _
  $region7: #{forward.3} parent=0 // pred_check_branch
    %12 = sbr.rel (0) target = $region9
  $region8: #{forward.3} parent=0 // pred_region
    _
  $region9: #{forward.3} parent=0 // pred_fallthru
    _
  // Predicated region
  $region10: #{forward.3} parent=0 // pred_check
    _
  $region11: #{forward.3} parent=0 // pred_check_branch
    %14 = sbr.rel (0) target = $region13
  $region12: #{forward.3} parent=0 // pred_region
    _
  $region13: #{forward.3} parent=0 // pred_fallthru
    _
  // Predicated region
  $region14: #{forward.3} parent=0 // pred_check
    _
  $region15: #{forward.3} parent=0 // pred_check_branch
    %16 = sbr.rel (0) target = $region17
  $region16: #{forward.3} parent=0 // pred_region
    _
  $region17: #{forward.3} parent=0 // pred_fallthru
    _
  %v18 = vld [vmem:[%s0] sm:$0xff]
  %v19 = vld [vmem:[%s0 + $0x8] sm:$0xff]
  %v20 = vld [vmem:[%s0 + $0x10] sm:$0xff]
  %v21 = vld [vmem:[%s0 + $0x18] sm:$0xff]
  %v22 = vld [vmem:[%s0 + $0x20] sm:$0xff]
  %v23 = vld [vmem:[%s0 + $0x28] sm:$0xff]
  %v24 = vld [vmem:[%s0 + $0x30] sm:$0xff]
  %v25 = vld [vmem:[%s0 + $0x38] sm:$0xff]
  %v26 = vld [vmem:[%s0 + $0x40] sm:$0xff]
  %v27 = vld [vmem:[%s0 + $0x48] sm:$0xff]
  %v28 = vld [vmem:[%s0 + $0x50] sm:$0xff]
  %v29 = vld [vmem:[%s0 + $0x58] sm:$0xff]
  %v30 = vld [vmem:[%s0 + $0x60] sm:$0xff]
  %v31 = vld [vmem:[%s0 + $0x68] sm:$0xff]
  %v32 = vld [vmem:[%s0 + $0x70] sm:$0xff]
  %v33 = vld [vmem:[%s0 + $0x78] sm:$0xff]
  %v34 = vld [vmem:[%s1] sm:$0x1]
  %v36 = vlaneseq
  %v37 = vshrl.u32 %v36, 7
  %v38 = vsub.s32 0, %v37
  %v39 = vrot.slane %v34, %v38
  %v41 = vadd.f32 %v18, %v39
  %v42 = vadd.f32 %v19, %v39
  %v43 = vadd.f32 %v20, %v39
  %v44 = vadd.f32 %v21, %v39
  %v45 = vadd.f32 %v22, %v39
  %v46 = vadd.f32 %v23, %v39
  %v47 = vadd.f32 %v24, %v39
  %v48 = vadd.f32 %v25, %v39
  %v49 = vadd.f32 %v26, %v39
  %v50 = vadd.f32 %v27, %v39
  %v51 = vadd.f32 %v28, %v39
  %v52 = vadd.f32 %v29, %v39
  %v53 = vadd.f32 %v30, %v39
  %v54 = vadd.f32 %v31, %v39
  %v55 = vadd.f32 %v32, %v39
  %v56 = vadd.f32 %v33, %v39
  %v57 = vmax.f32 %v41, 0.0
  %v58 = vmax.f32 %v42, 0.0
  %v59 = vmax.f32 %v43, 0.0
  %v60 = vmax.f32 %v44, 0.0
  %v61 = vmax.f32 %v45, 0.0
  %v62 = vmax.f32 %v46, 0.0
  %v63 = vmax.f32 %v47, 0.0
  %v64 = vmax.f32 %v48, 0.0
  %v65 = vmax.f32 %v49, 0.0
  %v66 = vmax.f32 %v50, 0.0
  %v67 = vmax.f32 %v51, 0.0
  %v68 = vmax.f32 %v52, 0.0
  %v69 = vmax.f32 %v53, 0.0
  %v70 = vmax.f32 %v54, 0.0
  %v71 = vmax.f32 %v55, 0.0
  %v72 = vmax.f32 %v56, 0.0
  %v73 = vpack.c.bf16 %v58, %v57
  %v74 = vpack.c.bf16 %v60, %v59
  %v75 = vpack.c.bf16 %v62, %v61
  %v76 = vpack.c.bf16 %v64, %v63
  %v77 = vpack.c.bf16 %v66, %v65
  %v78 = vpack.c.bf16 %v68, %v67
  %v79 = vpack.c.bf16 %v70, %v69
  %v80 = vpack.c.bf16 %v72, %v71
  %v81 = vld [vmem:[%s2] sm:$0xf]
  %v82 = vld [vmem:[%s2 + $0x4] sm:$0xf]
  %v83 = vld [vmem:[%s2 + $0x8] sm:$0xf]
  %v84 = vld [vmem:[%s2 + $0xc] sm:$0xf]
  %v85 = vld [vmem:[%s2 + $0x10] sm:$0xf]
  %v86 = vld [vmem:[%s2 + $0x14] sm:$0xf]
  %v87 = vld [vmem:[%s2 + $0x18] sm:$0xf]
  %v88 = vld [vmem:[%s2 + $0x1c] sm:$0xf]
  %v89 = vld [vmem:[%s2 + $0x20] sm:$0xf]
  %v90 = vld [vmem:[%s2 + $0x24] sm:$0xf]
  %v91 = vld [vmem:[%s2 + $0x28] sm:$0xf]
  %v92 = vld [vmem:[%s2 + $0x2c] sm:$0xf]
  %v93 = vld [vmem:[%s2 + $0x30] sm:$0xf]
  %v94 = vld [vmem:[%s2 + $0x34] sm:$0xf]
  %v95 = vld [vmem:[%s2 + $0x38] sm:$0xf]
  %v96 = vld [vmem:[%s2 + $0x3c] sm:$0xf]
  %v97 = vld [vmem:[%s3] sm:$0x1]
  %v99 = vlaneseq
  %v100 = vshrl.u32 %v99, 7
  %v101 = vsub.s32 0, %v100
  %v102 = vrot.slane %v97, %v101
  %v120 = vunpack.c.l.b16 %v81
  %v121 = vunpack.c.l.b16 %v82
  %v122 = vunpack.c.l.b16 %v83
  %v123 = vunpack.c.l.b16 %v84
  %v124 = vunpack.c.l.b16 %v85
  %v125 = vunpack.c.l.b16 %v86
  %v126 = vunpack.c.l.b16 %v87
  %v127 = vunpack.c.l.b16 %v88
  %v128 = vunpack.c.l.b16 %v89
  %v129 = vunpack.c.l.b16 %v90
  %v130 = vunpack.c.l.b16 %v91
  %v131 = vunpack.c.l.b16 %v92
  %v132 = vunpack.c.l.b16 %v93
  %v133 = vunpack.c.l.b16 %v94
  %v134 = vunpack.c.l.b16 %v95
  %v135 = vunpack.c.l.b16 %v96
  %v136 = vpack.c.b16 %v121, %v120
  %v137 = vpack.c.b16 %v123, %v122
  %v138 = vpack.c.b16 %v125, %v124
  %v139 = vpack.c.b16 %v127, %v126
  %v140 = vpack.c.b16 %v129, %v128
  %v141 = vpack.c.b16 %v131, %v130
  %v142 = vpack.c.b16 %v133, %v132
  %v143 = vpack.c.b16 %v135, %v134
  %152 = vmatprep.subr.bf16.mxu0 0
  %153 = vmatpush1.bf16.msra.mxu0 %v143
  %154 = vmatprep.subr.bf16.mxu0 0
  %155 = vmatpush1.bf16.msra.mxu0 %v142
  %156 = vmatprep.subr.bf16.mxu0 0
  %157 = vmatpush1.bf16.msra.mxu0 %v141
  %158 = vmatprep.subr.bf16.mxu0 0
  %159 = vmatpush1.bf16.msra.mxu0 %v140
  %160 = vmatprep.subr.bf16.mxu0 0
  %161 = vmatpush1.bf16.msra.mxu0 %v139
  %162 = vmatprep.subr.bf16.mxu0 0
  %163 = vmatpush1.bf16.msra.mxu0 %v138
  %164 = vmatprep.subr.bf16.mxu0 0
  %165 = vmatpush1.bf16.msra.mxu0 %v137
  %166 = vmatprep.subr.bf16.mxu0 0
  %167 = vmatpush1.bf16.msra.mxu0 %v136
  %168 = vmatprep.subr.bf16.mxu0 0
  %169 = vmatpush2.bf16.msra.mxu0 0
  %170 = vmatprep.subr.bf16.mxu0 0
  %171 = vmatpush2.bf16.msra.mxu0 0
  %172 = vmatprep.subr.bf16.mxu0 0
  %173 = vmatpush2.bf16.msra.mxu0 0
  %174 = vmatprep.subr.bf16.mxu0 0
  %175 = vmatpush2.bf16.msra.mxu0 0
  %176 = vmatprep.subr.bf16.mxu0 0
  %177 = vmatpush2.bf16.msra.mxu0 0
  %178 = vmatprep.subr.bf16.mxu0 0
  %179 = vmatpush2.bf16.msra.mxu0 0
  %180 = vmatprep.subr.bf16.mxu0 0
  %181 = vmatpush2.bf16.msra.mxu0 0
  %182 = vmatprep.subr.bf16.mxu0 0
  %183 = vmatpush2.bf16.msra.mxu0 0
  %184 = vmatprep.mubr.bf16.mxu0 0
  %185 = vmatmul.mubr.bf16.gmra.mxu0 %v73
  %v186 = vpop.f32.mrf.mxu0
  %v187 = vadd.f32 %v102, %v186
  %v188 = vpop.f32.mrf.mxu0
  %v189 = vpop.f32.mrf.mxu0
  %v190 = vadd.f32 %v102, %v189
  %v191 = vpop.f32.mrf.mxu0
  %192 = vmatprep.mubr.bf16.mxu0 0
  %193 = vmatmul.mubr.bf16.gmra.mxu0 %v74
  %v194 = vpop.f32.mrf.mxu0
  %v195 = vadd.f32 %v102, %v194
  %v196 = vpop.f32.mrf.mxu0
  %v197 = vpop.f32.mrf.mxu0
  %v198 = vadd.f32 %v102, %v197
  %v199 = vpop.f32.mrf.mxu0
  %200 = vmatprep.mubr.bf16.mxu0 0
  %201 = vmatmul.mubr.bf16.gmra.mxu0 %v75
  %v202 = vpop.f32.mrf.mxu0
  %v203 = vadd.f32 %v102, %v202
  %v204 = vpop.f32.mrf.mxu0
  %v205 = vpop.f32.mrf.mxu0
  %v206 = vadd.f32 %v102, %v205
  %v207 = vpop.f32.mrf.mxu0
  %208 = vmatprep.mubr.bf16.mxu0 0
  %209 = vmatmul.mubr.bf16.gmra.mxu0 %v76
  %v210 = vpop.f32.mrf.mxu0
  %v211 = vadd.f32 %v102, %v210
  %v212 = vpop.f32.mrf.mxu0
  %v213 = vpop.f32.mrf.mxu0
  %v214 = vadd.f32 %v102, %v213
  %v215 = vpop.f32.mrf.mxu0
  %216 = vmatprep.mubr.bf16.mxu0 0
  %217 = vmatmul.mubr.bf16.gmra.mxu0 %v77
  %v218 = vpop.f32.mrf.mxu0
  %v219 = vadd.f32 %v102, %v218
  %v220 = vpop.f32.mrf.mxu0
  %v221 = vpop.f32.mrf.mxu0
  %v222 = vadd.f32 %v102, %v221
  %v223 = vpop.f32.mrf.mxu0
  %224 = vmatprep.mubr.bf16.mxu0 0
  %225 = vmatmul.mubr.bf16.gmra.mxu0 %v78
  %v226 = vpop.f32.mrf.mxu0
  %v227 = vadd.f32 %v102, %v226
  %v228 = vpop.f32.mrf.mxu0
  %v229 = vpop.f32.mrf.mxu0
  %v230 = vadd.f32 %v102, %v229
  %v231 = vpop.f32.mrf.mxu0
  %232 = vmatprep.mubr.bf16.mxu0 0
  %233 = vmatmul.mubr.bf16.gmra.mxu0 %v79
  %v234 = vpop.f32.mrf.mxu0
  %v235 = vadd.f32 %v102, %v234
  %v236 = vpop.f32.mrf.mxu0
  %v237 = vpop.f32.mrf.mxu0
  %v238 = vadd.f32 %v102, %v237
  %v239 = vpop.f32.mrf.mxu0
  %240 = vmatprep.mubr.bf16.mxu0 0
  %241 = vmatmul.mubr.bf16.gmra.mxu0 %v80
  %v242 = vpop.f32.mrf.mxu0
  %v243 = vadd.f32 %v102, %v242
  %v244 = vpop.f32.mrf.mxu0
  %v245 = vpop.f32.mrf.mxu0
  %v246 = vadd.f32 %v102, %v245
  %v247 = vpop.f32.mrf.mxu0
  %248 = vdwg.mxu0
  %v249 = vpack.c.bf16 %v190, %v187
  %v250 = vpack.c.bf16 %v198, %v195
  %v251 = vpack.c.bf16 %v206, %v203
  %v252 = vpack.c.bf16 %v214, %v211
  %v253 = vpack.c.bf16 %v222, %v219
  %v254 = vpack.c.bf16 %v230, %v227
  %v255 = vpack.c.bf16 %v238, %v235
  %v256 = vpack.c.bf16 %v246, %v243
  %v265 = vunpack.c.l.b16 %v249
  %v266 = vunpack.c.h.b16 %v249
  %v267 = vunpack.c.l.b16 %v250
  %v268 = vunpack.c.h.b16 %v250
  %v269 = vunpack.c.l.b16 %v251
  %v270 = vunpack.c.h.b16 %v251
  %v271 = vunpack.c.l.b16 %v252
  %v272 = vunpack.c.h.b16 %v252
  %v273 = vunpack.c.l.b16 %v253
  %v274 = vunpack.c.h.b16 %v253
  %v275 = vunpack.c.l.b16 %v254
  %v276 = vunpack.c.h.b16 %v254
  %v277 = vunpack.c.l.b16 %v255
  %v278 = vunpack.c.h.b16 %v255
  %v279 = vunpack.c.l.b16 %v256
  %v280 = vunpack.c.h.b16 %v256
  %v281 = vpack.c.b16 %v265, %v265
  %v282 = vpack.c.b16 %v266, %v266
  %v283 = vpack.c.b16 %v267, %v267
  %v284 = vpack.c.b16 %v268, %v268
  %v285 = vpack.c.b16 %v269, %v269
  %v286 = vpack.c.b16 %v270, %v270
  %v287 = vpack.c.b16 %v271, %v271
  %v288 = vpack.c.b16 %v272, %v272
  %v289 = vpack.c.b16 %v273, %v273
  %v290 = vpack.c.b16 %v274, %v274
  %v291 = vpack.c.b16 %v275, %v275
  %v292 = vpack.c.b16 %v276, %v276
  %v293 = vpack.c.b16 %v277, %v277
  %v294 = vpack.c.b16 %v278, %v278
  %v295 = vpack.c.b16 %v279, %v279
  %v296 = vpack.c.b16 %v280, %v280
  %313 = vst [vmem:[%s4] sm:$0xf] %v281
  %314 = vst [vmem:[%s4 + $0x4] sm:$0xf] %v282
  %315 = vst [vmem:[%s4 + $0x8] sm:$0xf] %v283
  %316 = vst [vmem:[%s4 + $0xc] sm:$0xf] %v284
  %317 = vst [vmem:[%s4 + $0x10] sm:$0xf] %v285
  %318 = vst [vmem:[%s4 + $0x14] sm:$0xf] %v286
  %319 = vst [vmem:[%s4 + $0x18] sm:$0xf] %v287
  %320 = vst [vmem:[%s4 + $0x1c] sm:$0xf] %v288
  %321 = vst [vmem:[%s4 + $0x20] sm:$0xf] %v289
  %322 = vst [vmem:[%s4 + $0x24] sm:$0xf] %v290
  %323 = vst [vmem:[%s4 + $0x28] sm:$0xf] %v291
  %324 = vst [vmem:[%s4 + $0x2c] sm:$0xf] %v292
  %325 = vst [vmem:[%s4 + $0x30] sm:$0xf] %v293
  %326 = vst [vmem:[%s4 + $0x34] sm:$0xf] %v294
  %327 = vst [vmem:[%s4 + $0x38] sm:$0xf] %v295
  %328 = vst [vmem:[%s4 + $0x3c] sm:$0xf] %v296
  // Predicated region
  $region18: #{forward.3} parent=0 // pred_check
    _
  $region19: #{forward.3} parent=0 // pred_check_branch
    %330 = sbr.rel (0) target = $region21
  $region20: #{forward.3} parent=0 // pred_region
    _
  $region21: #{forward.3} parent=0 // pred_fallthru
    _
  // Predicated region
  $region22: #{forward.3} parent=0 // pred_check
    _
  $region23: #{forward.3} parent=0 // pred_check_branch
    %332 = sbr.rel (0) target = $region25
  $region24: #{forward.3} parent=0 // pred_region
    _
  $region25: #{forward.3} parent=0 // pred_fallthru
    _

// kernel: forward.4
$region0: #{forward.4}
  #allocation0 [shape = 'u32[]', space=smem, size = 0x4, offset = 0x4, fixed_abs, tag = 'smem constant byte address 0x4 - core index']
  #allocation1 [shape = 'u32[144,128]{1,0:T(1,128)}', space=vmem, size = 0x12000, scoped, tag = 'internal scratch']
  #allocation2 [shape = 'f32[128,128]{1,0:T(8,128)}', space=vmem, size = 0x10000, scoped, tag = 'scratch operand']
  %s0 = inlined_call_operand.vmem [shape: s8[9,128,128], index: 0, kind: input, shape index: {}]
  %s1 = inlined_call_operand.vmem [shape: bf16[128,128], index: 1, kind: input, shape index: {}]
  %s2 = inlined_call_operand.vmem [shape: bf16[9,128,128], index: 2, kind: input, shape index: {}]
  %s3 = inlined_call_operand.vmem [shape: f32[1,128], index: 3, kind: input, shape index: {}]
  %s4 = inlined_call_operand.vmem [shape: f32[128,1], index: 4, kind: input, shape index: {}]
  %s5 = inlined_call_operand.vmem [shape: bf16[128,128], index: 5, kind: output, shape index: {}]
  %s6 = sld [smem:[#allocation0]]
  $region61: #{forward.4} parent=0
    _
  %s8 = ssub.s32 1, %s6
  %s9 = scalar_select 0, %s8, %s6
  loop: start=0, step=1, limit=11
  $region2: #{forward.4} parent=0 // loop_pre_header
    _
  $region3: #{forward.4} parent=0 // loop_header
    %s11 = sphi 0, %s15
    %p12 = scmp.ge.s32.totalorder %s11, 11
    %s18 = sphi 0, %s37
    %s19 = sphi 0, %s33
    %s20 = sphi 0, %s29
    %s21 = sphi 0, %s18
    %s22 = sphi 0, %s19
    %s23 = sphi 0, %s20
    %s24 = sphi 0, %s21
    %s25 = sphi 0, %s22
    %s26 = sphi 0, %s23
    %s44 = sphi 0, %s46
    %s47 = sphi 0, %s44
    %s48 = sphi 0, %s47
    %s64 = sphi 0, %s48
    %s70 = sphi 0, %s72
    %s73 = sphi 0, %s70
    %s74 = sphi 0, %s73
    %s90 = sphi 0, %s74
    %s96 = sphi 0, %s98
    %s99 = sphi 0, %s96
    %s100 = sphi 0, %s99
    %s116 = sphi 0, %s100
    %s120 = sphi 0, %s120
    %s122 = sphi 0, %s120
    %s123 = sphi 0, %s122
    %s137 = sphi 0, %s123
    %s143 = sphi 0, %s145
    %s146 = sphi 0, %s143
    %s147 = sphi 0, %s146
    %s163 = sphi 0, %s147
    %s169 = sphi 0, %s171
    %s172 = sphi 0, %s169
    %s173 = sphi 0, %s172
    %s189 = sphi 0, %s173
  $region4: #{forward.4} parent=0 // loop_header_branch
    %14 = sbr.rel (%p12) target = $region8
  $region5: #{forward.4} parent=0 // loop_body
    %s16 = ssub.s32 %s11, 1
    %s17 = ssub.s32 %s11, 2
    %s27 = sadd.s32 1, %s20
    %p28 = scmp.ge.s32.totalorder %s27, 9
    %s29 = scalar_select %p28, 0, %s27
    %s30 = sadd.s32 1, %s19
    %s31 = scalar_select %p28, %s30, %s19
    %p32 = scmp.ge.s32.totalorder %s31, 1
    %s33 = scalar_select %p32, 0, %s31
    %s34 = sadd.s32 1, %s18
    %s35 = scalar_select %p32, %s34, %s18
    %p36 = scmp.ge.s32.totalorder %s35, 1
    %s37 = scalar_select %p36, 0, %s35
    %s38 = ssub.s32 %s20, %s29
    %s39 = ssub.s32 %s18, %s37
    %s40 = sor.u32 %s38, %s39
    %s41 = ssub.s32 %s19, %s33
    %s42 = sor.u32 %s40, %s41
    %p43 = scmp.eq.s32.totalorder %s42, 0
    %s45 = sadd.s32 %s44, 1
    %s46 = scalar_select %p43, %s44, %s45
    %p49 = pneg %p43
    %p50 = scmp.eq.s32.totalorder %s11, 8
    %p51 = por %p49, %p50
    %p52 = scmp.ne.s32.totalorder %s44, %s47
    %p53 = scmp.eq.s32.totalorder %s11, 0
    %p54 = por %p52, %p53
    %p55 = scmp.ne.s32.totalorder %s44, %s47
    %p56 = scmp.eq.s32.totalorder %s16, 8
    %p57 = por %p55, %p56
    %p58 = scmp.ne.s32.totalorder %s47, %s48
    %p59 = scmp.eq.s32.totalorder %s16, 0
    %p60 = por %p58, %p59
    %p61 = scmp.ne.s32.totalorder %s47, %s48
    %p62 = scmp.eq.s32.totalorder %s17, 8
    %p63 = por %p61, %p62
    %p65 = scmp.ne.s32.totalorder %s48, %s64
    %p66 = scmp.eq.s32.totalorder %s17, 0
    %p67 = por %p65, %p66
    %s68 = ssub.s32 %s19, %s33
    %p69 = scmp.eq.s32.totalorder %s68, 0
    %s71 = sadd.s32 %s70, 1
    %s72 = scalar_select %p69, %s70, %s71
    %p75 = pneg %p69
    %p76 = scmp.eq.s32.totalorder %s11, 8
    %p77 = por %p75, %p76
    %p78 = scmp.ne.s32.totalorder %s70, %s73
    %p79 = scmp.eq.s32.totalorder %s11, 0
    %p80 = por %p78, %p79
    %p81 = scmp.ne.s32.totalorder %s70, %s73
    %p82 = scmp.eq.s32.totalorder %s16, 8
    %p83 = por %p81, %p82
    %p84 = scmp.ne.s32.totalorder %s73, %s74
    %p85 = scmp.eq.s32.totalorder %s16, 0
    %p86 = por %p84, %p85
    %p87 = scmp.ne.s32.totalorder %s73, %s74
    %p88 = scmp.eq.s32.totalorder %s17, 8
    %p89 = por %p87, %p88
    %p91 = scmp.ne.s32.totalorder %s74, %s90
    %p92 = scmp.eq.s32.totalorder %s17, 0
    %p93 = por %p91, %p92
    %s94 = ssub.s32 %s20, %s29
    %p95 = scmp.eq.s32.totalorder %s94, 0
    %s97 = sadd.s32 %s96, 1
    %s98 = scalar_select %p95, %s96, %s97
    %p101 = pneg %p95
    %p102 = scmp.eq.s32.totalorder %s11, 8
    %p103 = por %p101, %p102
    %p104 = scmp.ne.s32.totalorder %s96, %s99
    %p105 = scmp.eq.s32.totalorder %s11, 0
    %p106 = por %p104, %p105
    %p107 = scmp.ne.s32.totalorder %s96, %s99
    %p108 = scmp.eq.s32.totalorder %s16, 8
    %p109 = por %p107, %p108
    %p110 = scmp.ne.s32.totalorder %s99, %s100
    %p111 = scmp.eq.s32.totalorder %s16, 0
    %p112 = por %p110, %p111
    %p113 = scmp.ne.s32.totalorder %s99, %s100
    %p114 = scmp.eq.s32.totalorder %s17, 8
    %p115 = por %p113, %p114
    %p117 = scmp.ne.s32.totalorder %s100, %s116
    %p118 = scmp.eq.s32.totalorder %s17, 0
    %p119 = por %p117, %p118
    %s121 = sadd.s32 %s120, 1
    %p124 = scmp.eq.s32.totalorder %s11, 8
    %p125 = scmp.ne.s32.totalorder %s120, %s122
    %p126 = scmp.eq.s32.totalorder %s11, 0
    %p127 = por %p125, %p126
    %p128 = scmp.ne.s32.totalorder %s120, %s122
    %p129 = scmp.eq.s32.totalorder %s16, 8
    %p130 = por %p128, %p129
    %p131 = scmp.ne.s32.totalorder %s122, %s123
    %p132 = scmp.eq.s32.totalorder %s16, 0
    %p133 = por %p131, %p132
    %p134 = scmp.ne.s32.totalorder %s122, %s123
    %p135 = scmp.eq.s32.totalorder %s17, 8
    %p136 = por %p134, %p135
    %p138 = scmp.ne.s32.totalorder %s123, %s137
    %p139 = scmp.eq.s32.totalorder %s17, 0
    %p140 = por %p138, %p139
    %s141 = ssub.s32 %s18, %s37
    %p142 = scmp.eq.s32.totalorder %s141, 0
    %s144 = sadd.s32 %s143, 1
    %s145 = scalar_select %p142, %s143, %s144
    %p148 = pneg %p142
    %p149 = scmp.eq.s32.totalorder %s11, 8
    %p150 = por %p148, %p149
    %p151 = scmp.ne.s32.totalorder %s143, %s146
    %p152 = scmp.eq.s32.totalorder %s11, 0
    %p153 = por %p151, %p152
    %p154 = scmp.ne.s32.totalorder %s143, %s146
    %p155 = scmp.eq.s32.totalorder %s16, 8
    %p156 = por %p154, %p155
    %p157 = scmp.ne.s32.totalorder %s146, %s147
    %p158 = scmp.eq.s32.totalorder %s16, 0
    %p159 = por %p157, %p158
    %p160 = scmp.ne.s32.totalorder %s146, %s147
    %p161 = scmp.eq.s32.totalorder %s17, 8
    %p162 = por %p160, %p161
    %p164 = scmp.ne.s32.totalorder %s147, %s163
    %p165 = scmp.eq.s32.totalorder %s17, 0
    %p166 = por %p164, %p165
    %s167 = ssub.s32 %s18, %s37
    %p168 = scmp.eq.s32.totalorder %s167, 0
    %s170 = sadd.s32 %s169, 1
    %s171 = scalar_select %p168, %s169, %s170
    %p174 = pneg %p168
    %p175 = scmp.eq.s32.totalorder %s11, 8
    %p176 = por %p174, %p175
    %p177 = scmp.ne.s32.totalorder %s169, %s172
    %p178 = scmp.eq.s32.totalorder %s11, 0
    %p179 = por %p177, %p178
    %p180 = scmp.ne.s32.totalorder %s169, %s172
    %p181 = scmp.eq.s32.totalorder %s16, 8
    %p182 = por %p180, %p181
    %p183 = scmp.ne.s32.totalorder %s172, %s173
    %p184 = scmp.eq.s32.totalorder %s16, 0
    %p185 = por %p183, %p184
    %p186 = scmp.ne.s32.totalorder %s172, %s173
    %p187 = scmp.eq.s32.totalorder %s17, 8
    %p188 = por %p186, %p187
    %p190 = scmp.ne.s32.totalorder %s173, %s189
    %p191 = scmp.eq.s32.totalorder %s17, 0
    %p192 = por %p190, %p191
    %p193 = scmp.le.s32.totalorder 1, %s11
    %p194 = scmp.lt.s32.totalorder %s11, 10
    %p195 = pnand %p193, %p194
    %p196 = pneg %p195
    // Predicated region
    $region9: #{forward.4} parent=5 // pred_check
      _
    $region10: #{forward.4} parent=5 // pred_check_branch
      %198 = sbr.rel (%p195) target = $region12
    $region11: #{forward.4} parent=5 // pred_region
      %s199 = ssub.s32 %s11, 1
      // Predicated region
      $region13: #{forward.4} parent=11 // pred_check
        %p200 = pneg %p86
      $region14: #{forward.4} parent=11 // pred_check_branch
        %202 = sbr.rel (%p200) target = $region16
      $region15: #{forward.4} parent=11 // pred_region
        %s203 = smul.u32 16, %s22
        %p204 = scmp.lt.s32.totalorder %s203, 15
        %s205 = scalar_select %p204, %s203, 15
        %s206 = smul.addr %s205, 4
        %s207 = scalar_lea.vmem %s1, %s206
        %s208 = smul.u32 16, %s22
      $region16: #{forward.4} parent=11 // pred_fallthru
        _
      // Predicated region
      $region17: #{forward.4} parent=11 // pred_check
        %p209 = pneg %p133
      $region18: #{forward.4} parent=11 // pred_check_branch
        %211 = sbr.rel (%p209) target = $region20
      $region19: #{forward.4} parent=11 // pred_region
        _
      $region20: #{forward.4} parent=11 // pred_fallthru
        _
      // Predicated region
      $region21: #{forward.4} parent=11 // pred_check
        %p212 = pneg %p159
      $region22: #{forward.4} parent=11 // pred_check_branch
        %214 = sbr.rel (%p212) target = $region24
      $region23: #{forward.4} parent=11 // pred_region
        %s215 = smul.u32 16, %s21
        %p216 = scmp.lt.s32.totalorder %s215, 15
        %s217 = scalar_select %p216, %s215, 15
        %s218 = smul.addr %s217, 8
        %s219 = scalar_lea.vmem %s4, %s218
        %s220 = smul.u32 16, %s21
      $region24: #{forward.4} parent=11 // pred_fallthru
        _
    $region12: #{forward.4} parent=5 // pred_fallthru
      _
    %p221 = scmp.lt.s32.totalorder %s11, 9
    // Predicated region
    $region25: #{forward.4} parent=5 // pred_check
      %p222 = pneg %p221
    $region26: #{forward.4} parent=5 // pred_check_branch
      %224 = sbr.rel (%p222) target = $region28
    $region27: #{forward.4} parent=5 // pred_region
      // Predicated region
      $region29: #{forward.4} parent=27 // pred_check
        %p225 = pneg %p54
      $region30: #{forward.4} parent=27 // pred_check_branch
        %227 = sbr.rel (%p225) target = $region32
      $region31: #{forward.4} parent=27 // pred_region
        %s228 = smul.u32 4, %s18
        %p229 = scmp.lt.s32.totalorder %s20, 8
        %s230 = scalar_select %p229, %s20, 8
        %p231 = scmp.lt.s32.totalorder %s228, 3
        %s232 = scalar_select %p231, %s228, 3
        %p233 = scmp.lt.s32.totalorder %s19, 0
        %s234 = scalar_select %p233, %s19, 0
        %s235 = sadd.s32 %s234, %s232
        %s236 = smul.addr %s230, 4
        %s237 = sadd.s32 %s235, %s236
        %s238 = smul.addr %s237, 8
        %s239 = scalar_lea.vmem %s0, %s238
        %s240 = smul.u32 4, %s18
      $region32: #{forward.4} parent=27 // pred_fallthru
        _
      // Predicated region
      $region33: #{forward.4} parent=27 // pred_check
        %p241 = pneg %p106
      $region34: #{forward.4} parent=27 // pred_check_branch
        %243 = sbr.rel (%p241) target = $region36
      $region35: #{forward.4} parent=27 // pred_region
        %p244 = scmp.lt.s32.totalorder %s20, 8
        %s245 = scalar_select %p244, %s20, 8
        %s246 = smul.addr %s245, 16
        %s247 = smul.addr %s246, 4
        %s248 = scalar_lea.vmem %s2, %s247
      $region36: #{forward.4} parent=27 // pred_fallthru
        _
    $region28: #{forward.4} parent=5 // pred_fallthru
      _
    %p249 = scmp.le.s32.totalorder 1, %s11
    %p250 = scmp.lt.s32.totalorder %s11, 10
    %p251 = pnand %p249, %p250
    %p252 = pneg %p251
    // Predicated region
    $region37: #{forward.4} parent=5 // pred_check
      _
    $region38: #{forward.4} parent=5 // pred_check_branch
      %254 = sbr.rel (%p251) target = $region40
    $region39: #{forward.4} parent=5 // pred_region
      %s255 = ssub.s32 %s11, 1
      %s256 = smul.u32 4, %s21
      %p257 = scmp.lt.s32.totalorder %s23, 8
      %s258 = scalar_select %p257, %s23, 8
      %p259 = scmp.lt.s32.totalorder %s256, 3
      %s260 = scalar_select %p259, %s256, 3
      %p261 = scmp.lt.s32.totalorder %s22, 0
      %s262 = scalar_select %p261, %s22, 0
      %s263 = sadd.s32 %s262, %s260
      %s264 = smul.addr %s258, 4
      %s265 = sadd.s32 %s263, %s264
      %s266 = smul.addr %s265, 8
      %s267 = scalar_lea.vmem %s0, %s266
      %p268 = pneg %p60
      %p269 = pneg %p57
      %s270 = smul.u32 16, %s22
      %p271 = scmp.lt.s32.totalorder %s270, 15
      %s272 = scalar_select %p271, %s270, 15
      %s273 = smul.addr %s272, 4
      %s274 = scalar_lea.vmem %s1, %s273
      %p275 = pneg %p86
      %p276 = pneg %p83
      %p277 = scmp.lt.s32.totalorder %s23, 8
      %s278 = scalar_select %p277, %s23, 8
      %s279 = smul.addr %s278, 16
      %s280 = smul.addr %s279, 4
      %s281 = scalar_lea.vmem %s2, %s280
      %p282 = pneg %p112
      %p283 = pneg %p109
      %p284 = pneg %p133
      %p285 = pneg %p130
      %s286 = smul.u32 16, %s21
      %p287 = scmp.lt.s32.totalorder %s286, 15
      %s288 = scalar_select %p287, %s286, 15
      %s289 = smul.addr %s288, 8
      %s290 = scalar_lea.vmem %s4, %s289
      %p291 = pneg %p159
      %p292 = pneg %p156
      %p293 = pneg %p185
      %p294 = pneg %p182
      %s295 = smul.u32 16, %s21
      %p296 = scmp.lt.s32.totalorder %s295, 15
      %s297 = scalar_select %p296, %s295, 15
      %s298 = smul.addr %s297, 4
      %s299 = scalar_lea.vmem %s5, %s298
      %s300 = smul.u32 4, %s21
      %p301 = scmp.lt.s32.totalorder %s23, 8
      %s302 = scalar_select %p301, %s23, 8
      %p303 = scmp.lt.s32.totalorder %s300, 3
      %s304 = scalar_select %p303, %s300, 3
      %p305 = scmp.lt.s32.totalorder %s22, 0
      %s306 = scalar_select %p305, %s22, 0
      %s307 = sadd.s32 %s306, %s304
      %s308 = smul.addr %s302, 4
      %s309 = sadd.s32 %s307, %s308
      %s310 = smul.addr %s309, 8
      %s311 = scalar_lea.vmem %s0, %s310
      %s312 = smul.u32 4, %s21
      %s313 = smul.u32 16, %s22
      %p314 = scmp.lt.s32.totalorder %s313, 15
      %s315 = scalar_select %p314, %s313, 15
      %s316 = smul.addr %s315, 4
      %s317 = scalar_lea.vmem %s1, %s316
      %s318 = smul.u32 16, %s22
      %p319 = scmp.lt.s32.totalorder %s23, 8
      %s320 = scalar_select %p319, %s23, 8
      %s321 = smul.addr %s320, 16
      %s322 = smul.addr %s321, 4
      %s323 = scalar_lea.vmem %s2, %s322
      %s324 = smul.u32 16, %s21
      %p325 = scmp.lt.s32.totalorder %s324, 15
      %s326 = scalar_select %p325, %s324, 15
      %s327 = smul.addr %s326, 8
      %s328 = scalar_lea.vmem %s4, %s327
      %s329 = smul.u32 16, %s21
      %s330 = smul.u32 16, %s21
      %p331 = scmp.lt.s32.totalorder %s330, 15
      %s332 = scalar_select %p331, %s330, 15
      %s333 = smul.addr %s332, 4
      %s334 = scalar_lea.vmem %s5, %s333
      %s335 = smul.u32 16, %s21
      %p337 = scmp.eq.s32.totalorder %s22, 0
      %p338 = scmp.eq.s32.totalorder %s23, 0
      %p339 = pnand %p337, %p338
      %p340 = pneg %p339
      // Predicated region
      $region41: #{forward.4} parent=39 // pred_check
        _
      $region42: #{forward.4} parent=39 // pred_check_branch
        %342 = sbr.rel (%p339) target = $region44
      $region43: #{forward.4} parent=39 // pred_region
        %343 = vst [vmem:[#allocation2] sm:$0xff] 0.0
        %344 = vst [vmem:[#allocation2 + $0x8] sm:$0xff] 0.0
        %345 = vst [vmem:[#allocation2 + $0x10] sm:$0xff] 0.0
        %346 = vst [vmem:[#allocation2 + $0x18] sm:$0xff] 0.0
        %347 = vst [vmem:[#allocation2 + $0x20] sm:$0xff] 0.0
        %348 = vst [vmem:[#allocation2 + $0x28] sm:$0xff] 0.0
        %349 = vst [vmem:[#allocation2 + $0x30] sm:$0xff] 0.0
        %350 = vst [vmem:[#allocation2 + $0x38] sm:$0xff] 0.0
        %351 = vst [vmem:[#allocation2 + $0x40] sm:$0xff] 0.0
        %352 = vst [vmem:[#allocation2 + $0x48] sm:$0xff] 0.0
        %353 = vst [vmem:[#allocation2 + $0x50] sm:$0xff] 0.0
        %354 = vst [vmem:[#allocation2 + $0x58] sm:$0xff] 0.0
        %355 = vst [vmem:[#allocation2 + $0x60] sm:$0xff] 0.0
        %356 = vst [vmem:[#allocation2 + $0x68] sm:$0xff] 0.0
        %357 = vst [vmem:[#allocation2 + $0x70] sm:$0xff] 0.0
        %358 = vst [vmem:[#allocation2 + $0x78] sm:$0xff] 0.0
      $region44: #{forward.4} parent=39 // pred_fallthru
        _
      %v359 = vld [vmem:[%s311] sm:$0xff]
      %v360 = vld [vmem:[%s311 + $0x8] sm:$0xff]
      %v361 = vld [vmem:[%s311 + $0x10] sm:$0xff]
      %v362 = vld [vmem:[%s311 + $0x18] sm:$0xff]
      %v363 = vunpack.c.l.s8.bf16 %v359
      %v364 = vunpack.c.h.s8.bf16 %v359
      %v365 = vunpack.c.l.s8.bf16 %v360
      %v366 = vunpack.c.h.s8.bf16 %v360
      %v367 = vunpack.c.l.s8.bf16 %v361
      %v368 = vunpack.c.h.s8.bf16 %v361
      %v369 = vunpack.c.l.s8.bf16 %v362
      %v370 = vunpack.c.h.s8.bf16 %v362
      %v371 = vld [vmem:[%s317] sm:$0xf]
      %v372 = vld [vmem:[%s317 + $0x4] sm:$0xf]
      %v373 = vld [vmem:[%s317 + $0x8] sm:$0xf]
      %v374 = vld [vmem:[%s317 + $0xc] sm:$0xf]
      %v375 = vld [vmem:[%s317 + $0x10] sm:$0xf]
      %v376 = vld [vmem:[%s317 + $0x14] sm:$0xf]
      %v377 = vld [vmem:[%s317 + $0x18] sm:$0xf]
      %v378 = vld [vmem:[%s317 + $0x1c] sm:$0xf]
      %v379 = vld [vmem:[%s317 + $0x20] sm:$0xf]
      %v380 = vld [vmem:[%s317 + $0x24] sm:$0xf]
      %v381 = vld [vmem:[%s317 + $0x28] sm:$0xf]
      %v382 = vld [vmem:[%s317 + $0x2c] sm:$0xf]
      %v383 = vld [vmem:[%s317 + $0x30] sm:$0xf]
      %v384 = vld [vmem:[%s317 + $0x34] sm:$0xf]
      %v385 = vld [vmem:[%s317 + $0x38] sm:$0xf]
      %v386 = vld [vmem:[%s317 + $0x3c] sm:$0xf]
      %v403 = vunpack.c.l.b16 %v371
      %v404 = vunpack.c.l.b16 %v372
      %v405 = vunpack.c.l.b16 %v373
      %v406 = vunpack.c.l.b16 %v374
      %v407 = vunpack.c.l.b16 %v375
      %v408 = vunpack.c.l.b16 %v376
      %v409 = vunpack.c.l.b16 %v377
      %v410 = vunpack.c.l.b16 %v378
      %v411 = vunpack.c.l.b16 %v379
      %v412 = vunpack.c.l.b16 %v380
      %v413 = vunpack.c.l.b16 %v381
      %v414 = vunpack.c.l.b16 %v382
      %v415 = vunpack.c.l.b16 %v383
      %v416 = vunpack.c.l.b16 %v384
      %v417 = vunpack.c.l.b16 %v385
      %v418 = vunpack.c.l.b16 %v386
      %v419 = vpack.c.b16 %v404, %v403
      %v420 = vpack.c.b16 %v406, %v405
      %v421 = vpack.c.b16 %v408, %v407
      %v422 = vpack.c.b16 %v410, %v409
      %v423 = vpack.c.b16 %v412, %v411
      %v424 = vpack.c.b16 %v414, %v413
      %v425 = vpack.c.b16 %v416, %v415
      %v426 = vpack.c.b16 %v418, %v417
      %435 = vmatprep.subr.bf16.mxu0 0
      %436 = vmatpush1.bf16.msra.mxu0 %v426
      %437 = vmatprep.subr.bf16.mxu0 0
      %438 = vmatpush1.bf16.msra.mxu0 %v425
      %439 = vmatprep.subr.bf16.mxu0 0
      %440 = vmatpush1.bf16.msra.mxu0 %v424
      %441 = vmatprep.subr.bf16.mxu0 0
      %442 = vmatpush1.bf16.msra.mxu0 %v423
      %443 = vmatprep.subr.bf16.mxu0 0
      %444 = vmatpush1.bf16.msra.mxu0 %v422
      %445 = vmatprep.subr.bf16.mxu0 0
      %446 = vmatpush1.bf16.msra.mxu0 %v421
      %447 = vmatprep.subr.bf16.mxu0 0
      %448 = vmatpush1.bf16.msra.mxu0 %v420
      %449 = vmatprep.subr.bf16.mxu0 0
      %450 = vmatpush1.bf16.msra.mxu0 %v419
      %451 = vmatprep.subr.bf16.mxu0 0
      %452 = vmatpush2.bf16.msra.mxu0 0
      %453 = vmatprep.subr.bf16.mxu0 0
      %454 = vmatpush2.bf16.msra.mxu0 0
      %455 = vmatprep.subr.bf16.mxu0 0
      %456 = vmatpush2.bf16.msra.mxu0 0
      %457 = vmatprep.subr.bf16.mxu0 0
      %458 = vmatpush2.bf16.msra.mxu0 0
      %459 = vmatprep.subr.bf16.mxu0 0
      %460 = vmatpush2.bf16.msra.mxu0 0
      %461 = vmatprep.subr.bf16.mxu0 0
      %462 = vmatpush2.bf16.msra.mxu0 0
      %463 = vmatprep.subr.bf16.mxu0 0
      %464 = vmatpush2.bf16.msra.mxu0 0
      %465 = vmatprep.subr.bf16.mxu0 0
      %466 = vmatpush2.bf16.msra.mxu0 0
      %467 = vmatprep.mubr.bf16.mxu0 0
      %468 = vmatmul.mubr.bf16.gmra.mxu0 %v363
      %v469 = vpop.f32.mrf.mxu0
      %v470 = vadd.f32 0.0, %v469
      %v471 = vpop.f32.mrf.mxu0
      %v472 = vpop.f32.mrf.mxu0
      %v473 = vadd.f32 0.0, %v472
      %v474 = vpop.f32.mrf.mxu0
      %475 = vmatprep.mubr.bf16.mxu0 0
      %476 = vmatmul.mubr.bf16.gmra.mxu0 %v364
      %v477 = vpop.f32.mrf.mxu0
      %v478 = vadd.f32 0.0, %v477
      %v479 = vpop.f32.mrf.mxu0
      %v480 = vpop.f32.mrf.mxu0
      %v481 = vadd.f32 0.0, %v480
      %v482 = vpop.f32.mrf.mxu0
      %483 = vmatprep.mubr.bf16.mxu0 0
      %484 = vmatmul.mubr.bf16.gmra.mxu0 %v365
      %v485 = vpop.f32.mrf.mxu0
      %v486 = vadd.f32 0.0, %v485
      %v487 = vpop.f32.mrf.mxu0
      %v488 = vpop.f32.mrf.mxu0
      %v489 = vadd.f32 0.0, %v488
      %v490 = vpop.f32.mrf.mxu0
      %491 = vmatprep.mubr.bf16.mxu0 0
      %492 = vmatmul.mubr.bf16.gmra.mxu0 %v366
      %v493 = vpop.f32.mrf.mxu0
      %v494 = vadd.f32 0.0, %v493
      %v495 = vpop.f32.mrf.mxu0
      %v496 = vpop.f32.mrf.mxu0
      %v497 = vadd.f32 0.0, %v496
      %v498 = vpop.f32.mrf.mxu0
      %499 = vmatprep.mubr.bf16.mxu0 0
      %500 = vmatmul.mubr.bf16.gmra.mxu0 %v367
      %v501 = vpop.f32.mrf.mxu0
      %v502 = vadd.f32 0.0, %v501
      %v503 = vpop.f32.mrf.mxu0
      %v504 = vpop.f32.mrf.mxu0
      %v505 = vadd.f32 0.0, %v504
      %v506 = vpop.f32.mrf.mxu0
      %507 = vmatprep.mubr.bf16.mxu0 0
      %508 = vmatmul.mubr.bf16.gmra.mxu0 %v368
      %v509 = vpop.f32.mrf.mxu0
      %v510 = vadd.f32 0.0, %v509
      %v511 = vpop.f32.mrf.mxu0
      %v512 = vpop.f32.mrf.mxu0
      %v513 = vadd.f32 0.0, %v512
      %v514 = vpop.f32.mrf.mxu0
      %515 = vmatprep.mubr.bf16.mxu0 0
      %516 = vmatmul.mubr.bf16.gmra.mxu0 %v369
      %v517 = vpop.f32.mrf.mxu0
      %v518 = vadd.f32 0.0, %v517
      %v519 = vpop.f32.mrf.mxu0
      %v520 = vpop.f32.mrf.mxu0
      %v521 = vadd.f32 0.0, %v520
      %v522 = vpop.f32.mrf.mxu0
      %523 = vmatprep.mubr.bf16.mxu0 0
      %524 = vmatmul.mubr.bf16.gmra.mxu0 %v370
      %v525 = vpop.f32.mrf.mxu0
      %v526 = vadd.f32 0.0, %v525
      %v527 = vpop.f32.mrf.mxu0
      %v528 = vpop.f32.mrf.mxu0
      %v529 = vadd.f32 0.0, %v528
      %v530 = vpop.f32.mrf.mxu0
      %531 = vdwg.mxu0
      %v532 = vld [vmem:[#allocation2] sm:$0xff]
      %v533 = vld [vmem:[#allocation2 + $0x8] sm:$0xff]
      %v534 = vld [vmem:[#allocation2 + $0x10] sm:$0xff]
      %v535 = vld [vmem:[#allocation2 + $0x18] sm:$0xff]
      %v536 = vld [vmem:[#allocation2 + $0x20] sm:$0xff]
      %v537 = vld [vmem:[#allocation2 + $0x28] sm:$0xff]
      %v538 = vld [vmem:[#allocation2 + $0x30] sm:$0xff]
      %v539 = vld [vmem:[#allocation2 + $0x38] sm:$0xff]
      %v540 = vld [vmem:[#allocation2 + $0x40] sm:$0xff]
      %v541 = vld [vmem:[#allocation2 + $0x48] sm:$0xff]
      %v542 = vld [vmem:[#allocation2 + $0x50] sm:$0xff]
      %v543 = vld [vmem:[#allocation2 + $0x58] sm:$0xff]
      %v544 = vld [vmem:[#allocation2 + $0x60] sm:$0xff]
      %v545 = vld [vmem:[#allocation2 + $0x68] sm:$0xff]
      %v546 = vld [vmem:[#allocation2 + $0x70] sm:$0xff]
      %v547 = vld [vmem:[#allocation2 + $0x78] sm:$0xff]
      %v548 = vpack.c.bf16 %v473, %v470
      %v549 = vpack.c.bf16 %v481, %v478
      %v550 = vpack.c.bf16 %v489, %v486
      %v551 = vpack.c.bf16 %v497, %v494
      %v552 = vpack.c.bf16 %v505, %v502
      %v553 = vpack.c.bf16 %v513, %v510
      %v554 = vpack.c.bf16 %v521, %v518
      %v555 = vpack.c.bf16 %v529, %v526
      %v556 = vld [vmem:[%s323] sm:$0xf]
      %v557 = vld [vmem:[%s323 + $0x4] sm:$0xf]
      %v558 = vld [vmem:[%s323 + $0x8] sm:$0xf]
      %v559 = vld [vmem:[%s323 + $0xc] sm:$0xf]
      %v560 = vld [vmem:[%s323 + $0x10] sm:$0xf]
      %v561 = vld [vmem:[%s323 + $0x14] sm:$0xf]
      %v562 = vld [vmem:[%s323 + $0x18] sm:$0xf]
      %v563 = vld [vmem:[%s323 + $0x1c] sm:$0xf]
      %v564 = vld [vmem:[%s323 + $0x20] sm:$0xf]
      %v565 = vld [vmem:[%s323 + $0x24] sm:$0xf]
      %v566 = vld [vmem:[%s323 + $0x28] sm:$0xf]
      %v567 = vld [vmem:[%s323 + $0x2c] sm:$0xf]
      %v568 = vld [vmem:[%s323 + $0x30] sm:$0xf]
      %v569 = vld [vmem:[%s323 + $0x34] sm:$0xf]
      %v570 = vld [vmem:[%s323 + $0x38] sm:$0xf]
      %v571 = vld [vmem:[%s323 + $0x3c] sm:$0xf]
      %v588 = vunpack.c.l.b16 %v556
      %v589 = vunpack.c.l.b16 %v557
      %v590 = vunpack.c.l.b16 %v558
      %v591 = vunpack.c.l.b16 %v559
      %v592 = vunpack.c.l.b16 %v560
      %v593 = vunpack.c.l.b16 %v561
      %v594 = vunpack.c.l.b16 %v562
      %v595 = vunpack.c.l.b16 %v563
      %v596 = vunpack.c.l.b16 %v564
      %v597 = vunpack.c.l.b16 %v565
      %v598 = vunpack.c.l.b16 %v566
      %v599 = vunpack.c.l.b16 %v567
      %v600 = vunpack.c.l.b16 %v568
      %v601 = vunpack.c.l.b16 %v569
      %v602 = vunpack.c.l.b16 %v570
      %v603 = vunpack.c.l.b16 %v571
      %v604 = vpack.c.b16 %v589, %v588
      %v605 = vpack.c.b16 %v591, %v590
      %v606 = vpack.c.b16 %v593, %v592
      %v607 = vpack.c.b16 %v595, %v594
      %v608 = vpack.c.b16 %v597, %v596
      %v609 = vpack.c.b16 %v599, %v598
      %v610 = vpack.c.b16 %v601, %v600
      %v611 = vpack.c.b16 %v603, %v602
      %620 = vmatprep.subr.bf16.mxu0 0
      %621 = vmatpush1.bf16.msra.mxu0 %v611
      %622 = vmatprep.subr.bf16.mxu0 0
      %623 = vmatpush1.bf16.msra.mxu0 %v610
      %624 = vmatprep.subr.bf16.mxu0 0
      %625 = vmatpush1.bf16.msra.mxu0 %v609
      %626 = vmatprep.subr.bf16.mxu0 0
      %627 = vmatpush1.bf16.msra.mxu0 %v608
      %628 = vmatprep.subr.bf16.mxu0 0
      %629 = vmatpush1.bf16.msra.mxu0 %v607
      %630 = vmatprep.subr.bf16.mxu0 0
      %631 = vmatpush1.bf16.msra.mxu0 %v606
      %632 = vmatprep.subr.bf16.mxu0 0
      %633 = vmatpush1.bf16.msra.mxu0 %v605
      %634 = vmatprep.subr.bf16.mxu0 0
      %635 = vmatpush1.bf16.msra.mxu0 %v604
      %636 = vmatprep.subr.bf16.mxu0 0
      %637 = vmatpush2.bf16.msra.mxu0 0
      %638 = vmatprep.subr.bf16.mxu0 0
      %639 = vmatpush2.bf16.msra.mxu0 0
      %640 = vmatprep.subr.bf16.mxu0 0
      %641 = vmatpush2.bf16.msra.mxu0 0
      %642 = vmatprep.subr.bf16.mxu0 0
      %643 = vmatpush2.bf16.msra.mxu0 0
      %644 = vmatprep.subr.bf16.mxu0 0
      %645 = vmatpush2.bf16.msra.mxu0 0
      %646 = vmatprep.subr.bf16.mxu0 0
      %647 = vmatpush2.bf16.msra.mxu0 0
      %648 = vmatprep.subr.bf16.mxu0 0
      %649 = vmatpush2.bf16.msra.mxu0 0
      %650 = vmatprep.subr.bf16.mxu0 0
      %651 = vmatpush2.bf16.msra.mxu0 0
      %652 = vmatprep.mubr.bf16.mxu0 0
      %653 = vmatmul.mubr.bf16.gmra.mxu0 %v548
      %v654 = vpop.f32.mrf.mxu0
      %v655 = vadd.f32 0.0, %v654
      %v656 = vpop.f32.mrf.mxu0
      %v657 = vpop.f32.mrf.mxu0
      %v658 = vadd.f32 0.0, %v657
      %v659 = vpop.f32.mrf.mxu0
      %660 = vmatprep.mubr.bf16.mxu0 0
      %661 = vmatmul.mubr.bf16.gmra.mxu0 %v549
      %v662 = vpop.f32.mrf.mxu0
      %v663 = vadd.f32 0.0, %v662
      %v664 = vpop.f32.mrf.mxu0
      %v665 = vpop.f32.mrf.mxu0
      %v666 = vadd.f32 0.0, %v665
      %v667 = vpop.f32.mrf.mxu0
      %668 = vmatprep.mubr.bf16.mxu0 0
      %669 = vmatmul.mubr.bf16.gmra.mxu0 %v550
      %v670 = vpop.f32.mrf.mxu0
      %v671 = vadd.f32 0.0, %v670
      %v672 = vpop.f32.mrf.mxu0
      %v673 = vpop.f32.mrf.mxu0
      %v674 = vadd.f32 0.0, %v673
      %v675 = vpop.f32.mrf.mxu0
      %676 = vmatprep.mubr.bf16.mxu0 0
      %677 = vmatmul.mubr.bf16.gmra.mxu0 %v551
      %v678 = vpop.f32.mrf.mxu0
      %v679 = vadd.f32 0.0, %v678
      %v680 = vpop.f32.mrf.mxu0
      %v681 = vpop.f32.mrf.mxu0
      %v682 = vadd.f32 0.0, %v681
      %v683 = vpop.f32.mrf.mxu0
      %684 = vmatprep.mubr.bf16.mxu0 0
      %685 = vmatmul.mubr.bf16.gmra.mxu0 %v552
      %v686 = vpop.f32.mrf.mxu0
      %v687 = vadd.f32 0.0, %v686
      %v688 = vpop.f32.mrf.mxu0
      %v689 = vpop.f32.mrf.mxu0
      %v690 = vadd.f32 0.0, %v689
      %v691 = vpop.f32.mrf.mxu0
      %692 = vmatprep.mubr.bf16.mxu0 0
      %693 = vmatmul.mubr.bf16.gmra.mxu0 %v553
      %v694 = vpop.f32.mrf.mxu0
      %v695 = vadd.f32 0.0, %v694
      %v696 = vpop.f32.mrf.mxu0
      %v697 = vpop.f32.mrf.mxu0
      %v698 = vadd.f32 0.0, %v697
      %v699 = vpop.f32.mrf.mxu0
      %700 = vmatprep.mubr.bf16.mxu0 0
      %701 = vmatmul.mubr.bf16.gmra.mxu0 %v554
      %v702 = vpop.f32.mrf.mxu0
      %v703 = vadd.f32 0.0, %v702
      %v704 = vpop.f32.mrf.mxu0
      %v705 = vpop.f32.mrf.mxu0
      %v706 = vadd.f32 0.0, %v705
      %v707 = vpop.f32.mrf.mxu0
      %708 = vmatprep.mubr.bf16.mxu0 0
      %709 = vmatmul.mubr.bf16.gmra.mxu0 %v555
      %v710 = vpop.f32.mrf.mxu0
      %v711 = vadd.f32 0.0, %v710
      %v712 = vpop.f32.mrf.mxu0
      %v713 = vpop.f32.mrf.mxu0
      %v714 = vadd.f32 0.0, %v713
      %v715 = vpop.f32.mrf.mxu0
      %716 = vdwg.mxu0
      %v717 = vadd.f32 %v532, %v655
      %v718 = vadd.f32 %v533, %v658
      %v719 = vadd.f32 %v534, %v663
      %v720 = vadd.f32 %v535, %v666
      %v721 = vadd.f32 %v536, %v671
      %v722 = vadd.f32 %v537, %v674
      %v723 = vadd.f32 %v538, %v679
      %v724 = vadd.f32 %v539, %v682
      %v725 = vadd.f32 %v540, %v687
      %v726 = vadd.f32 %v541, %v690
      %v727 = vadd.f32 %v542, %v695
      %v728 = vadd.f32 %v543, %v698
      %v729 = vadd.f32 %v544, %v703
      %v730 = vadd.f32 %v545, %v706
      %v731 = vadd.f32 %v546, %v711
      %v732 = vadd.f32 %v547, %v714
      %733 = vst [vmem:[#allocation2] sm:$0xff] %v717
      %734 = vst [vmem:[#allocation2 + $0x8] sm:$0xff] %v718
      %735 = vst [vmem:[#allocation2 + $0x10] sm:$0xff] %v719
      %736 = vst [vmem:[#allocation2 + $0x18] sm:$0xff] %v720
      %737 = vst [vmem:[#allocation2 + $0x20] sm:$0xff] %v721
      %738 = vst [vmem:[#allocation2 + $0x28] sm:$0xff] %v722
      %739 = vst [vmem:[#allocation2 + $0x30] sm:$0xff] %v723
      %740 = vst [vmem:[#allocation2 + $0x38] sm:$0xff] %v724
      %741 = vst [vmem:[#allocation2 + $0x40] sm:$0xff] %v725
      %742 = vst [vmem:[#allocation2 + $0x48] sm:$0xff] %v726
      %743 = vst [vmem:[#allocation2 + $0x50] sm:$0xff] %v727
      %744 = vst [vmem:[#allocation2 + $0x58] sm:$0xff] %v728
      %745 = vst [vmem:[#allocation2 + $0x60] sm:$0xff] %v729
      %746 = vst [vmem:[#allocation2 + $0x68] sm:$0xff] %v730
      %747 = vst [vmem:[#allocation2 + $0x70] sm:$0xff] %v731
      %748 = vst [vmem:[#allocation2 + $0x78] sm:$0xff] %v732
      %p749 = scmp.eq.s32.totalorder %s23, 8
      %p750 = pnand %p337, %p749
      %p751 = pneg %p750
      // Predicated region
      $region45: #{forward.4} parent=39 // pred_check
        _
      $region46: #{forward.4} parent=39 // pred_check_branch
        %753 = sbr.rel (%p750) target = $region48
      $region47: #{forward.4} parent=39 // pred_region
        %v754 = vld [vmem:[#allocation2] sm:$0xff]
        %v755 = vld [vmem:[#allocation2 + $0x8] sm:$0xff]
        %v756 = vld [vmem:[#allocation2 + $0x10] sm:$0xff]
        %v757 = vld [vmem:[#allocation2 + $0x18] sm:$0xff]
        %v758 = vld [vmem:[#allocation2 + $0x20] sm:$0xff]
        %v759 = vld [vmem:[#allocation2 + $0x28] sm:$0xff]
        %v760 = vld [vmem:[#allocation2 + $0x30] sm:$0xff]
        %v761 = vld [vmem:[#allocation2 + $0x38] sm:$0xff]
        %v762 = vld [vmem:[#allocation2 + $0x40] sm:$0xff]
        %v763 = vld [vmem:[#allocation2 + $0x48] sm:$0xff]
        %v764 = vld [vmem:[#allocation2 + $0x50] sm:$0xff]
        %v765 = vld [vmem:[#allocation2 + $0x58] sm:$0xff]
        %v766 = vld [vmem:[#allocation2 + $0x60] sm:$0xff]
        %v767 = vld [vmem:[#allocation2 + $0x68] sm:$0xff]
        %v768 = vld [vmem:[#allocation2 + $0x70] sm:$0xff]
        %v769 = vld [vmem:[#allocation2 + $0x78] sm:$0xff]
        %v770 = vld [vmem:[%s328] sm:$0xff]
        %v771 = vld [vmem:[%s328 + $0x8] sm:$0xff]
        %v772 = vld [vmem:[%s328 + $0x10] sm:$0xff]
        %v773 = vld [vmem:[%s328 + $0x18] sm:$0xff]
        %v774 = vld [vmem:[%s328 + $0x20] sm:$0xff]
        %v775 = vld [vmem:[%s328 + $0x28] sm:$0xff]
        %v776 = vld [vmem:[%s328 + $0x30] sm:$0xff]
        %v777 = vld [vmem:[%s328 + $0x38] sm:$0xff]
        %v778 = vld [vmem:[%s328 + $0x40] sm:$0xff]
        %v779 = vld [vmem:[%s328 + $0x48] sm:$0xff]
        %v780 = vld [vmem:[%s328 + $0x50] sm:$0xff]
        %v781 = vld [vmem:[%s328 + $0x58] sm:$0xff]
        %v782 = vld [vmem:[%s328 + $0x60] sm:$0xff]
        %v783 = vld [vmem:[%s328 + $0x68] sm:$0xff]
        %v784 = vld [vmem:[%s328 + $0x70] sm:$0xff]
        %v785 = vld [vmem:[%s328 + $0x78] sm:$0xff]
        %787 = vset.pattern.permute.xlu0 0
        %788 = vperm.xlu0 %787, %v770
        %v789 = vpop.permute.xlu0 %788
        %792 = vset.pattern.permute.xlu0 0
        %793 = vperm.xlu0 %792, %v771
        %v794 = vpop.permute.xlu0 %793
        %797 = vset.pattern.permute.xlu0 0
        %798 = vperm.xlu0 %797, %v772
        %v799 = vpop.permute.xlu0 %798
        %802 = vset.pattern.permute.xlu0 0
        %803 = vperm.xlu0 %802, %v773
        %v804 = vpop.permute.xlu0 %803
        %807 = vset.pattern.permute.xlu0 0
        %808 = vperm.xlu0 %807, %v774
        %v809 = vpop.permute.xlu0 %808
        %812 = vset.pattern.permute.xlu0 0
        %813 = vperm.xlu0 %812, %v775
        %v814 = vpop.permute.xlu0 %813
        %817 = vset.pattern.permute.xlu0 0
        %818 = vperm.xlu0 %817, %v776
        %v819 = vpop.permute.xlu0 %818
        %822 = vset.pattern.permute.xlu0 0
        %823 = vperm.xlu0 %822, %v777
        %v824 = vpop.permute.xlu0 %823
        %827 = vset.pattern.permute.xlu0 0
        %828 = vperm.xlu0 %827, %v778
        %v829 = vpop.permute.xlu0 %828
        %832 = vset.pattern.permute.xlu0 0
        %833 = vperm.xlu0 %832, %v779
        %v834 = vpop.permute.xlu0 %833
        %837 = vset.pattern.permute.xlu0 0
        %838 = vperm.xlu0 %837, %v780
        %v839 = vpop.permute.xlu0 %838
        %842 = vset.pattern.permute.xlu0 0
        %843 = vperm.xlu0 %842, %v781
        %v844 = vpop.permute.xlu0 %843
        %847 = vset.pattern.permute.xlu0 0
        %848 = vperm.xlu0 %847, %v782
        %v849 = vpop.permute.xlu0 %848
        %852 = vset.pattern.permute.xlu0 0
        %853 = vperm.xlu0 %852, %v783
        %v854 = vpop.permute.xlu0 %853
        %857 = vset.pattern.permute.xlu0 0
        %858 = vperm.xlu0 %857, %v784
        %v859 = vpop.permute.xlu0 %858
        %862 = vset.pattern.permute.xlu0 0
        %863 = vperm.xlu0 %862, %v785
        %v864 = vpop.permute.xlu0 %863
        %v866 = vmul.f32 %v754, %v789
        %v867 = vmul.f32 %v755, %v794
        %v868 = vmul.f32 %v756, %v799
        %v869 = vmul.f32 %v757, %v804
        %v870 = vmul.f32 %v758, %v809
        %v871 = vmul.f32 %v759, %v814
        %v872 = vmul.f32 %v760, %v819
        %v873 = vmul.f32 %v761, %v824
        %v874 = vmul.f32 %v762, %v829
        %v875 = vmul.f32 %v763, %v834
        %v876 = vmul.f32 %v764, %v839
        %v877 = vmul.f32 %v765, %v844
        %v878 = vmul.f32 %v766, %v849
        %v879 = vmul.f32 %v767, %v854
        %v880 = vmul.f32 %v768, %v859
        %v881 = vmul.f32 %v769, %v864
        %v882 = vld [vmem:[%s3] sm:$0x1]
        %v884 = vlaneseq
        %v885 = vshrl.u32 %v884, 7
        %v886 = vsub.s32 0, %v885
        %v887 = vrot.slane %v882, %v886
        %v889 = vadd.f32 %v866, %v887
        %v890 = vadd.f32 %v867, %v887
        %v891 = vadd.f32 %v868, %v887
        %v892 = vadd.f32 %v869, %v887
        %v893 = vadd.f32 %v870, %v887
        %v894 = vadd.f32 %v871, %v887
        %v895 = vadd.f32 %v872, %v887
        %v896 = vadd.f32 %v873, %v887
        %v897 = vadd.f32 %v874, %v887
        %v898 = vadd.f32 %v875, %v887
        %v899 = vadd.f32 %v876, %v887
        %v900 = vadd.f32 %v877, %v887
        %v901 = vadd.f32 %v878, %v887
        %v902 = vadd.f32 %v879, %v887
        %v903 = vadd.f32 %v880, %v887
        %v904 = vadd.f32 %v881, %v887
        %v905 = vmax.f32 %v889, 0.0
        %v906 = vmax.f32 %v890, 0.0
        %v907 = vmax.f32 %v891, 0.0
        %v908 = vmax.f32 %v892, 0.0
        %v909 = vmax.f32 %v893, 0.0
        %v910 = vmax.f32 %v894, 0.0
        %v911 = vmax.f32 %v895, 0.0
        %v912 = vmax.f32 %v896, 0.0
        %v913 = vmax.f32 %v897, 0.0
        %v914 = vmax.f32 %v898, 0.0
        %v915 = vmax.f32 %v899, 0.0
        %v916 = vmax.f32 %v900, 0.0
        %v917 = vmax.f32 %v901, 0.0
        %v918 = vmax.f32 %v902, 0.0
        %v919 = vmax.f32 %v903, 0.0
        %v920 = vmax.f32 %v904, 0.0
        %v921 = vpack.c.bf16 %v906, %v905
        %v922 = vpack.c.bf16 %v908, %v907
        %v923 = vpack.c.bf16 %v910, %v909
        %v924 = vpack.c.bf16 %v912, %v911
        %v925 = vpack.c.bf16 %v914, %v913
        %v926 = vpack.c.bf16 %v916, %v915
        %v927 = vpack.c.bf16 %v918, %v917
        %v928 = vpack.c.bf16 %v920, %v919
        %v937 = vunpack.c.l.b16 %v921
        %v938 = vunpack.c.h.b16 %v921
        %v939 = vunpack.c.l.b16 %v922
        %v940 = vunpack.c.h.b16 %v922
        %v941 = vunpack.c.l.b16 %v923
        %v942 = vunpack.c.h.b16 %v923
        %v943 = vunpack.c.l.b16 %v924
        %v944 = vunpack.c.h.b16 %v924
        %v945 = vunpack.c.l.b16 %v925
        %v946 = vunpack.c.h.b16 %v925
        %v947 = vunpack.c.l.b16 %v926
        %v948 = vunpack.c.h.b16 %v926
        %v949 = vunpack.c.l.b16 %v927
        %v950 = vunpack.c.h.b16 %v927
        %v951 = vunpack.c.l.b16 %v928
        %v952 = vunpack.c.h.b16 %v928
        %v953 = vpack.c.b16 %v937, %v937
        %v954 = vpack.c.b16 %v938, %v938
        %v955 = vpack.c.b16 %v939, %v939
        %v956 = vpack.c.b16 %v940, %v940
        %v957 = vpack.c.b16 %v941, %v941
        %v958 = vpack.c.b16 %v942, %v942
        %v959 = vpack.c.b16 %v943, %v943
        %v960 = vpack.c.b16 %v944, %v944
        %v961 = vpack.c.b16 %v945, %v945
        %v962 = vpack.c.b16 %v946, %v946
        %v963 = vpack.c.b16 %v947, %v947
        %v964 = vpack.c.b16 %v948, %v948
        %v965 = vpack.c.b16 %v949, %v949
        %v966 = vpack.c.b16 %v950, %v950
        %v967 = vpack.c.b16 %v951, %v951
        %v968 = vpack.c.b16 %v952, %v952
        %985 = vst [vmem:[%s334] sm:$0xf] %v953
        %986 = vst [vmem:[%s334 + $0x4] sm:$0xf] %v954
        %987 = vst [vmem:[%s334 + $0x8] sm:$0xf] %v955
        %988 = vst [vmem:[%s334 + $0xc] sm:$0xf] %v956
        %989 = vst [vmem:[%s334 + $0x10] sm:$0xf] %v957
        %990 = vst [vmem:[%s334 + $0x14] sm:$0xf] %v958
        %991 = vst [vmem:[%s334 + $0x18] sm:$0xf] %v959
        %992 = vst [vmem:[%s334 + $0x1c] sm:$0xf] %v960
        %993 = vst [vmem:[%s334 + $0x20] sm:$0xf] %v961
        %994 = vst [vmem:[%s334 + $0x24] sm:$0xf] %v962
        %995 = vst [vmem:[%s334 + $0x28] sm:$0xf] %v963
        %996 = vst [vmem:[%s334 + $0x2c] sm:$0xf] %v964
        %997 = vst [vmem:[%s334 + $0x30] sm:$0xf] %v965
        %998 = vst [vmem:[%s334 + $0x34] sm:$0xf] %v966
        %999 = vst [vmem:[%s334 + $0x38] sm:$0xf] %v967
        %1000 = vst [vmem:[%s334 + $0x3c] sm:$0xf] %v968
      $region48: #{forward.4} parent=39 // pred_fallthru
        _
      %s1001 = smul.u32 16, %s21
      %p1002 = scmp.lt.s32.totalorder %s1001, 15
      %s1003 = scalar_select %p1002, %s1001, 15
      %s1004 = smul.addr %s1003, 4
      %s1005 = scalar_lea.vmem %s5, %s1004
      // Predicated region
      $region49: #{forward.4} parent=39 // pred_check
        %p1006 = pneg %p182
      $region50: #{forward.4} parent=39 // pred_check_branch
        %1008 = sbr.rel (%p1006) target = $region52
      $region51: #{forward.4} parent=39 // pred_region
        %s1009 = smul.u32 16, %s21
      $region52: #{forward.4} parent=39 // pred_fallthru
        _
      // Predicated region
      $region53: #{forward.4} parent=39 // pred_check
        %p1010 = pneg %p182
      $region54: #{forward.4} parent=39 // pred_check_branch
        %1012 = sbr.rel (%p1010) target = $region56
      $region55: #{forward.4} parent=39 // pred_region
        %s1013 = smul.u32 16, %s21
        %p1014 = scmp.lt.s32.totalorder %s1013, 15
        %s1015 = scalar_select %p1014, %s1013, 15
        %s1016 = smul.addr %s1015, 4
        %s1017 = scalar_lea.vmem %s5, %s1016
      $region56: #{forward.4} parent=39 // pred_fallthru
        _
    $region40: #{forward.4} parent=5 // pred_fallthru
      _
    %p1018 = scmp.le.s32.totalorder 2, %s11
    // Predicated region
    $region57: #{forward.4} parent=5 // pred_check
      %p1019 = pneg %p1018
    $region58: #{forward.4} parent=5 // pred_check_branch
      %1021 = sbr.rel (%p1019) target = $region60
    $region59: #{forward.4} parent=5 // pred_region
      %s1022 = ssub.s32 %s11, 2
    $region60: #{forward.4} parent=5 // pred_fallthru
      _
  $region6: #{forward.4} parent=0 // loop_footer
    %s15 = sadd.s32 1, %s11
  $region7: #{forward.4} parent=0 // loop_footer_branch
    %10 = sbr.rel target = $region3
  $region8: #{forward.4} parent=0 // loop_exit
    _

// kernel: forward.5
$region0: #{forward.5}
  #allocation0 [shape = 'u32[]', space=smem, size = 0x4, offset = 0x4, fixed_abs, tag = 'smem constant byte address 0x4 - core index']
  #allocation1 [shape = 'u32[144,128]{1,0:T(1,128)}', space=vmem, size = 0x12000, scoped, tag = 'internal scratch']
  #allocation2 [shape = 'f32[128,128]{1,0:T(8,128)}', space=vmem, size = 0x10000, scoped, tag = 'scratch operand']
  %s0 = inlined_call_operand.vmem [shape: s8[9,128,128], index: 0, kind: input, shape index: {}]
  %s1 = inlined_call_operand.vmem [shape: bf16[128,128], index: 1, kind: input, shape index: {}]
  %s2 = inlined_call_operand.vmem [shape: bf16[9,128,128], index: 2, kind: input, shape index: {}]
  %s3 = inlined_call_operand.vmem [shape: f32[1,128], index: 3, kind: input, shape index: {}]
  %s4 = inlined_call_operand.vmem [shape: f32[128,1], index: 4, kind: input, shape index: {}]
  %s5 = inlined_call_operand.vmem [shape: f32[128,128], index: 5, kind: input, shape index: {}]
  %s6 = inlined_call_operand.vmem [shape: bf16[128,128], index: 6, kind: input, shape index: {}]
  %s7 = inlined_call_operand.vmem [shape: f32[1,128], index: 7, kind: input, shape index: {}]
  %s8 = inlined_call_operand.vmem [shape: f32[128,128], index: 8, kind: output, shape index: {}]
  %s9 = sld [smem:[#allocation0]]
  $region73: #{forward.5} parent=0
    _
  %s11 = ssub.s32 1, %s9
  %s12 = scalar_select 0, %s11, %s9
  loop: start=0, step=1, limit=11
  $region2: #{forward.5} parent=0 // loop_pre_header
    _
  $region3: #{forward.5} parent=0 // loop_header
    %s14 = sphi 0, %s18
    %p15 = scmp.ge.s32.totalorder %s14, 11
    %s21 = sphi 0, %s40
    %s22 = sphi 0, %s36
    %s23 = sphi 0, %s32
    %s24 = sphi 0, %s21
    %s25 = sphi 0, %s22
    %s26 = sphi 0, %s23
    %s27 = sphi 0, %s24
    %s28 = sphi 0, %s25
    %s29 = sphi 0, %s26
    %s47 = sphi 0, %s49
    %s50 = sphi 0, %s47
    %s51 = sphi 0, %s50
    %s67 = sphi 0, %s51
    %s73 = sphi 0, %s75
    %s76 = sphi 0, %s73
    %s77 = sphi 0, %s76
    %s93 = sphi 0, %s77
    %s99 = sphi 0, %s101
    %s102 = sphi 0, %s99
    %s103 = sphi 0, %s102
    %s119 = sphi 0, %s103
    %s123 = sphi 0, %s123
    %s125 = sphi 0, %s123
    %s126 = sphi 0, %s125
    %s140 = sphi 0, %s126
    %s146 = sphi 0, %s148
    %s149 = sphi 0, %s146
    %s150 = sphi 0, %s149
    %s166 = sphi 0, %s150
    %s172 = sphi 0, %s174
    %s175 = sphi 0, %s172
    %s176 = sphi 0, %s175
    %s192 = sphi 0, %s176
    %s196 = sphi 0, %s196
    %s198 = sphi 0, %s196
    %s199 = sphi 0, %s198
    %s213 = sphi 0, %s199
    %s217 = sphi 0, %s217
    %s219 = sphi 0, %s217
    %s220 = sphi 0, %s219
    %s234 = sphi 0, %s220
    %s240 = sphi 0, %s242
    %s243 = sphi 0, %s240
    %s244 = sphi 0, %s243
    %s260 = sphi 0, %s244
  $region4: #{forward.5} parent=0 // loop_header_branch
    %17 = sbr.rel (%p15) target = $region8
  $region5: #{forward.5} parent=0 // loop_body
    %s19 = ssub.s32 %s14, 1
    %s20 = ssub.s32 %s14, 2
    %s30 = sadd.s32 1, %s23
    %p31 = scmp.ge.s32.totalorder %s30, 9
    %s32 = scalar_select %p31, 0, %s30
    %s33 = sadd.s32 1, %s22
    %s34 = scalar_select %p31, %s33, %s22
    %p35 = scmp.ge.s32.totalorder %s34, 1
    %s36 = scalar_select %p35, 0, %s34
    %s37 = sadd.s32 1, %s21
    %s38 = scalar_select %p35, %s37, %s21
    %p39 = scmp.ge.s32.totalorder %s38, 1
    %s40 = scalar_select %p39, 0, %s38
    %s41 = ssub.s32 %s23, %s32
    %s42 = ssub.s32 %s21, %s40
    %s43 = sor.u32 %s41, %s42
    %s44 = ssub.s32 %s22, %s36
    %s45 = sor.u32 %s43, %s44
    %p46 = scmp.eq.s32.totalorder %s45, 0
    %s48 = sadd.s32 %s47, 1
    %s49 = scalar_select %p46, %s47, %s48
    %p52 = pneg %p46
    %p53 = scmp.eq.s32.totalorder %s14, 8
    %p54 = por %p52, %p53
    %p55 = scmp.ne.s32.totalorder %s47, %s50
    %p56 = scmp.eq.s32.totalorder %s14, 0
    %p57 = por %p55, %p56
    %p58 = scmp.ne.s32.totalorder %s47, %s50
    %p59 = scmp.eq.s32.totalorder %s19, 8
    %p60 = por %p58, %p59
    %p61 = scmp.ne.s32.totalorder %s50, %s51
    %p62 = scmp.eq.s32.totalorder %s19, 0
    %p63 = por %p61, %p62
    %p64 = scmp.ne.s32.totalorder %s50, %s51
    %p65 = scmp.eq.s32.totalorder %s20, 8
    %p66 = por %p64, %p65
    %p68 = scmp.ne.s32.totalorder %s51, %s67
    %p69 = scmp.eq.s32.totalorder %s20, 0
    %p70 = por %p68, %p69
    %s71 = ssub.s32 %s22, %s36
    %p72 = scmp.eq.s32.totalorder %s71, 0
    %s74 = sadd.s32 %s73, 1
    %s75 = scalar_select %p72, %s73, %s74
    %p78 = pneg %p72
    %p79 = scmp.eq.s32.totalorder %s14, 8
    %p80 = por %p78, %p79
    %p81 = scmp.ne.s32.totalorder %s73, %s76
    %p82 = scmp.eq.s32.totalorder %s14, 0
    %p83 = por %p81, %p82
    %p84 = scmp.ne.s32.totalorder %s73, %s76
    %p85 = scmp.eq.s32.totalorder %s19, 8
    %p86 = por %p84, %p85
    %p87 = scmp.ne.s32.totalorder %s76, %s77
    %p88 = scmp.eq.s32.totalorder %s19, 0
    %p89 = por %p87, %p88
    %p90 = scmp.ne.s32.totalorder %s76, %s77
    %p91 = scmp.eq.s32.totalorder %s20, 8
    %p92 = por %p90, %p91
    %p94 = scmp.ne.s32.totalorder %s77, %s93
    %p95 = scmp.eq.s32.totalorder %s20, 0
    %p96 = por %p94, %p95
    %s97 = ssub.s32 %s23, %s32
    %p98 = scmp.eq.s32.totalorder %s97, 0
    %s100 = sadd.s32 %s99, 1
    %s101 = scalar_select %p98, %s99, %s100
    %p104 = pneg %p98
    %p105 = scmp.eq.s32.totalorder %s14, 8
    %p106 = por %p104, %p105
    %p107 = scmp.ne.s32.totalorder %s99, %s102
    %p108 = scmp.eq.s32.totalorder %s14, 0
    %p109 = por %p107, %p108
    %p110 = scmp.ne.s32.totalorder %s99, %s102
    %p111 = scmp.eq.s32.totalorder %s19, 8
    %p112 = por %p110, %p111
    %p113 = scmp.ne.s32.totalorder %s102, %s103
    %p114 = scmp.eq.s32.totalorder %s19, 0
    %p115 = por %p113, %p114
    %p116 = scmp.ne.s32.totalorder %s102, %s103
    %p117 = scmp.eq.s32.totalorder %s20, 8
    %p118 = por %p116, %p117
    %p120 = scmp.ne.s32.totalorder %s103, %s119
    %p121 = scmp.eq.s32.totalorder %s20, 0
    %p122 = por %p120, %p121
    %s124 = sadd.s32 %s123, 1
    %p127 = scmp.eq.s32.totalorder %s14, 8
    %p128 = scmp.ne.s32.totalorder %s123, %s125
    %p129 = scmp.eq.s32.totalorder %s14, 0
    %p130 = por %p128, %p129
    %p131 = scmp.ne.s32.totalorder %s123, %s125
    %p132 = scmp.eq.s32.totalorder %s19, 8
    %p133 = por %p131, %p132
    %p134 = scmp.ne.s32.totalorder %s125, %s126
    %p135 = scmp.eq.s32.totalorder %s19, 0
    %p136 = por %p134, %p135
    %p137 = scmp.ne.s32.totalorder %s125, %s126
    %p138 = scmp.eq.s32.totalorder %s20, 8
    %p139 = por %p137, %p138
    %p141 = scmp.ne.s32.totalorder %s126, %s140
    %p142 = scmp.eq.s32.totalorder %s20, 0
    %p143 = por %p141, %p142
    %s144 = ssub.s32 %s21, %s40
    %p145 = scmp.eq.s32.totalorder %s144, 0
    %s147 = sadd.s32 %s146, 1
    %s148 = scalar_select %p145, %s146, %s147
    %p151 = pneg %p145
    %p152 = scmp.eq.s32.totalorder %s14, 8
    %p153 = por %p151, %p152
    %p154 = scmp.ne.s32.totalorder %s146, %s149
    %p155 = scmp.eq.s32.totalorder %s14, 0
    %p156 = por %p154, %p155
    %p157 = scmp.ne.s32.totalorder %s146, %s149
    %p158 = scmp.eq.s32.totalorder %s19, 8
    %p159 = por %p157, %p158
    %p160 = scmp.ne.s32.totalorder %s149, %s150
    %p161 = scmp.eq.s32.totalorder %s19, 0
    %p162 = por %p160, %p161
    %p163 = scmp.ne.s32.totalorder %s149, %s150
    %p164 = scmp.eq.s32.totalorder %s20, 8
    %p165 = por %p163, %p164
    %p167 = scmp.ne.s32.totalorder %s150, %s166
    %p168 = scmp.eq.s32.totalorder %s20, 0
    %p169 = por %p167, %p168
    %s170 = ssub.s32 %s21, %s40
    %p171 = scmp.eq.s32.totalorder %s170, 0
    %s173 = sadd.s32 %s172, 1
    %s174 = scalar_select %p171, %s172, %s173
    %p177 = pneg %p171
    %p178 = scmp.eq.s32.totalorder %s14, 8
    %p179 = por %p177, %p178
    %p180 = scmp.ne.s32.totalorder %s172, %s175
    %p181 = scmp.eq.s32.totalorder %s14, 0
    %p182 = por %p180, %p181
    %p183 = scmp.ne.s32.totalorder %s172, %s175
    %p184 = scmp.eq.s32.totalorder %s19, 8
    %p185 = por %p183, %p184
    %p186 = scmp.ne.s32.totalorder %s175, %s176
    %p187 = scmp.eq.s32.totalorder %s19, 0
    %p188 = por %p186, %p187
    %p189 = scmp.ne.s32.totalorder %s175, %s176
    %p190 = scmp.eq.s32.totalorder %s20, 8
    %p191 = por %p189, %p190
    %p193 = scmp.ne.s32.totalorder %s176, %s192
    %p194 = scmp.eq.s32.totalorder %s20, 0
    %p195 = por %p193, %p194
    %s197 = sadd.s32 %s196, 1
    %p200 = scmp.eq.s32.totalorder %s14, 8
    %p201 = scmp.ne.s32.totalorder %s196, %s198
    %p202 = scmp.eq.s32.totalorder %s14, 0
    %p203 = por %p201, %p202
    %p204 = scmp.ne.s32.totalorder %s196, %s198
    %p205 = scmp.eq.s32.totalorder %s19, 8
    %p206 = por %p204, %p205
    %p207 = scmp.ne.s32.totalorder %s198, %s199
    %p208 = scmp.eq.s32.totalorder %s19, 0
    %p209 = por %p207, %p208
    %p210 = scmp.ne.s32.totalorder %s198, %s199
    %p211 = scmp.eq.s32.totalorder %s20, 8
    %p212 = por %p210, %p211
    %p214 = scmp.ne.s32.totalorder %s199, %s213
    %p215 = scmp.eq.s32.totalorder %s20, 0
    %p216 = por %p214, %p215
    %s218 = sadd.s32 %s217, 1
    %p221 = scmp.eq.s32.totalorder %s14, 8
    %p222 = scmp.ne.s32.totalorder %s217, %s219
    %p223 = scmp.eq.s32.totalorder %s14, 0
    %p224 = por %p222, %p223
    %p225 = scmp.ne.s32.totalorder %s217, %s219
    %p226 = scmp.eq.s32.totalorder %s19, 8
    %p227 = por %p225, %p226
    %p228 = scmp.ne.s32.totalorder %s219, %s220
    %p229 = scmp.eq.s32.totalorder %s19, 0
    %p230 = por %p228, %p229
    %p231 = scmp.ne.s32.totalorder %s219, %s220
    %p232 = scmp.eq.s32.totalorder %s20, 8
    %p233 = por %p231, %p232
    %p235 = scmp.ne.s32.totalorder %s220, %s234
    %p236 = scmp.eq.s32.totalorder %s20, 0
    %p237 = por %p235, %p236
    %s238 = ssub.s32 %s21, %s40
    %p239 = scmp.eq.s32.totalorder %s238, 0
    %s241 = sadd.s32 %s240, 1
    %s242 = scalar_select %p239, %s240, %s241
    %p245 = pneg %p239
    %p246 = scmp.eq.s32.totalorder %s14, 8
    %p247 = por %p245, %p246
    %p248 = scmp.ne.s32.totalorder %s240, %s243
    %p249 = scmp.eq.s32.totalorder %s14, 0
    %p250 = por %p248, %p249
    %p251 = scmp.ne.s32.totalorder %s240, %s243
    %p252 = scmp.eq.s32.totalorder %s19, 8
    %p253 = por %p251, %p252
    %p254 = scmp.ne.s32.totalorder %s243, %s244
    %p255 = scmp.eq.s32.totalorder %s19, 0
    %p256 = por %p254, %p255
    %p257 = scmp.ne.s32.totalorder %s243, %s244
    %p258 = scmp.eq.s32.totalorder %s20, 8
    %p259 = por %p257, %p258
    %p261 = scmp.ne.s32.totalorder %s244, %s260
    %p262 = scmp.eq.s32.totalorder %s20, 0
    %p263 = por %p261, %p262
    %p264 = scmp.le.s32.totalorder 1, %s14
    %p265 = scmp.lt.s32.totalorder %s14, 10
    %p266 = pnand %p264, %p265
    %p267 = pneg %p266
    // Predicated region
    $region9: #{forward.5} parent=5 // pred_check
      _
    $region10: #{forward.5} parent=5 // pred_check_branch
      %269 = sbr.rel (%p266) target = $region12
    $region11: #{forward.5} parent=5 // pred_region
      %s270 = ssub.s32 %s14, 1
      // Predicated region
      $region13: #{forward.5} parent=11 // pred_check
        %p271 = pneg %p89
      $region14: #{forward.5} parent=11 // pred_check_branch
        %273 = sbr.rel (%p271) target = $region16
      $region15: #{forward.5} parent=11 // pred_region
        %s274 = smul.u32 16, %s25
        %p275 = scmp.lt.s32.totalorder %s274, 15
        %s276 = scalar_select %p275, %s274, 15
        %s277 = smul.addr %s276, 4
        %s278 = scalar_lea.vmem %s1, %s277
        %s279 = smul.u32 16, %s25
      $region16: #{forward.5} parent=11 // pred_fallthru
        _
      // Predicated region
      $region17: #{forward.5} parent=11 // pred_check
        %p280 = pneg %p136
      $region18: #{forward.5} parent=11 // pred_check_branch
        %282 = sbr.rel (%p280) target = $region20
      $region19: #{forward.5} parent=11 // pred_region
        _
      $region20: #{forward.5} parent=11 // pred_fallthru
        _
      // Predicated region
      $region21: #{forward.5} parent=11 // pred_check
        %p283 = pneg %p162
      $region22: #{forward.5} parent=11 // pred_check_branch
        %285 = sbr.rel (%p283) target = $region24
      $region23: #{forward.5} parent=11 // pred_region
        %s286 = smul.u32 16, %s24
        %p287 = scmp.lt.s32.totalorder %s286, 15
        %s288 = scalar_select %p287, %s286, 15
        %s289 = smul.addr %s288, 8
        %s290 = scalar_lea.vmem %s4, %s289
        %s291 = smul.u32 16, %s24
      $region24: #{forward.5} parent=11 // pred_fallthru
        _
      // Predicated region
      $region25: #{forward.5} parent=11 // pred_check
        %p292 = pneg %p188
      $region26: #{forward.5} parent=11 // pred_check_branch
        %294 = sbr.rel (%p292) target = $region28
      $region27: #{forward.5} parent=11 // pred_region
        %s295 = smul.u32 16, %s24
        %p296 = scmp.lt.s32.totalorder %s295, 15
        %s297 = scalar_select %p296, %s295, 15
        %s298 = smul.addr %s297, 8
        %s299 = scalar_lea.vmem %s5, %s298
        %s300 = smul.u32 16, %s24
      $region28: #{forward.5} parent=11 // pred_fallthru
        _
      // Predicated region
      $region29: #{forward.5} parent=11 // pred_check
        %p301 = pneg %p209
      $region30: #{forward.5} parent=11 // pred_check_branch
        %303 = sbr.rel (%p301) target = $region32
      $region31: #{forward.5} parent=11 // pred_region
        _
      $region32: #{forward.5} parent=11 // pred_fallthru
        _
      // Predicated region
      $region33: #{forward.5} parent=11 // pred_check
        %p304 = pneg %p230
      $region34: #{forward.5} parent=11 // pred_check_branch
        %306 = sbr.rel (%p304) target = $region36
      $region35: #{forward.5} parent=11 // pred_region
        _
      $region36: #{forward.5} parent=11 // pred_fallthru
        _
    $region12: #{forward.5} parent=5 // pred_fallthru
      _
    %p307 = scmp.lt.s32.totalorder %s14, 9
    // Predicated region
    $region37: #{forward.5} parent=5 // pred_check
      %p308 = pneg %p307
    $region38: #{forward.5} parent=5 // pred_check_branch
      %310 = sbr.rel (%p308) target = $region40
    $region39: #{forward.5} parent=5 // pred_region
      // Predicated region
      $region41: #{forward.5} parent=39 // pred_check
        %p311 = pneg %p57
      $region42: #{forward.5} parent=39 // pred_check_branch
        %313 = sbr.rel (%p311) target = $region44
      $region43: #{forward.5} parent=39 // pred_region
        %s314 = smul.u32 4, %s21
        %p315 = scmp.lt.s32.totalorder %s23, 8
        %s316 = scalar_select %p315, %s23, 8
        %p317 = scmp.lt.s32.totalorder %s314, 3
        %s318 = scalar_select %p317, %s314, 3
        %p319 = scmp.lt.s32.totalorder %s22, 0
        %s320 = scalar_select %p319, %s22, 0
        %s321 = sadd.s32 %s320, %s318
        %s322 = smul.addr %s316, 4
        %s323 = sadd.s32 %s321, %s322
        %s324 = smul.addr %s323, 8
        %s325 = scalar_lea.vmem %s0, %s324
        %s326 = smul.u32 4, %s21
      $region44: #{forward.5} parent=39 // pred_fallthru
        _
      // Predicated region
      $region45: #{forward.5} parent=39 // pred_check
        %p327 = pneg %p109
      $region46: #{forward.5} parent=39 // pred_check_branch
        %329 = sbr.rel (%p327) target = $region48
      $region47: #{forward.5} parent=39 // pred_region
        %p330 = scmp.lt.s32.totalorder %s23, 8
        %s331 = scalar_select %p330, %s23, 8
        %s332 = smul.addr %s331, 16
        %s333 = smul.addr %s332, 4
        %s334 = scalar_lea.vmem %s2, %s333
      $region48: #{forward.5} parent=39 // pred_fallthru
        _
    $region40: #{forward.5} parent=5 // pred_fallthru
      _
    %p335 = scmp.le.s32.totalorder 1, %s14
    %p336 = scmp.lt.s32.totalorder %s14, 10
    %p337 = pnand %p335, %p336
    %p338 = pneg %p337
    // Predicated region
    $region49: #{forward.5} parent=5 // pred_check
      _
    $region50: #{forward.5} parent=5 // pred_check_branch
      %340 = sbr.rel (%p337) target = $region52
    $region51: #{forward.5} parent=5 // pred_region
      %s341 = ssub.s32 %s14, 1
      %s342 = smul.u32 4, %s24
      %p343 = scmp.lt.s32.totalorder %s26, 8
      %s344 = scalar_select %p343, %s26, 8
      %p345 = scmp.lt.s32.totalorder %s342, 3
      %s346 = scalar_select %p345, %s342, 3
      %p347 = scmp.lt.s32.totalorder %s25, 0
      %s348 = scalar_select %p347, %s25, 0
      %s349 = sadd.s32 %s348, %s346
      %s350 = smul.addr %s344, 4
      %s351 = sadd.s32 %s349, %s350
      %s352 = smul.addr %s351, 8
      %s353 = scalar_lea.vmem %s0, %s352
      %p354 = pneg %p63
      %p355 = pneg %p60
      %s356 = smul.u32 16, %s25
      %p357 = scmp.lt.s32.totalorder %s356, 15
      %s358 = scalar_select %p357, %s356, 15
      %s359 = smul.addr %s358, 4
      %s360 = scalar_lea.vmem %s1, %s359
      %p361 = pneg %p89
      %p362 = pneg %p86
      %p363 = scmp.lt.s32.totalorder %s26, 8
      %s364 = scalar_select %p363, %s26, 8
      %s365 = smul.addr %s364, 16
      %s366 = smul.addr %s365, 4
      %s367 = scalar_lea.vmem %s2, %s366
      %p368 = pneg %p115
      %p369 = pneg %p112
      %p370 = pneg %p136
      %p371 = pneg %p133
      %s372 = smul.u32 16, %s24
      %p373 = scmp.lt.s32.totalorder %s372, 15
      %s374 = scalar_select %p373, %s372, 15
      %s375 = smul.addr %s374, 8
      %s376 = scalar_lea.vmem %s4, %s375
      %p377 = pneg %p162
      %p378 = pneg %p159
      %s379 = smul.u32 16, %s24
      %p380 = scmp.lt.s32.totalorder %s379, 15
      %s381 = scalar_select %p380, %s379, 15
      %s382 = smul.addr %s381, 8
      %s383 = scalar_lea.vmem %s5, %s382
      %p384 = pneg %p188
      %p385 = pneg %p185
      %p386 = pneg %p209
      %p387 = pneg %p206
      %p388 = pneg %p230
      %p389 = pneg %p227
      %p390 = pneg %p256
      %p391 = pneg %p253
      %s392 = smul.u32 16, %s24
      %p393 = scmp.lt.s32.totalorder %s392, 15
      %s394 = scalar_select %p393, %s392, 15
      %s395 = smul.addr %s394, 8
      %s396 = scalar_lea.vmem %s8, %s395
      %s397 = smul.u32 4, %s24
      %p398 = scmp.lt.s32.totalorder %s26, 8
      %s399 = scalar_select %p398, %s26, 8
      %p400 = scmp.lt.s32.totalorder %s397, 3
      %s401 = scalar_select %p400, %s397, 3
      %p402 = scmp.lt.s32.totalorder %s25, 0
      %s403 = scalar_select %p402, %s25, 0
      %s404 = sadd.s32 %s403, %s401
      %s405 = smul.addr %s399, 4
      %s406 = sadd.s32 %s404, %s405
      %s407 = smul.addr %s406, 8
      %s408 = scalar_lea.vmem %s0, %s407
      %s409 = smul.u32 4, %s24
      %s410 = smul.u32 16, %s25
      %p411 = scmp.lt.s32.totalorder %s410, 15
      %s412 = scalar_select %p411, %s410, 15
      %s413 = smul.addr %s412, 4
      %s414 = scalar_lea.vmem %s1, %s413
      %s415 = smul.u32 16, %s25
      %p416 = scmp.lt.s32.totalorder %s26, 8
      %s417 = scalar_select %p416, %s26, 8
      %s418 = smul.addr %s417, 16
      %s419 = smul.addr %s418, 4
      %s420 = scalar_lea.vmem %s2, %s419
      %s421 = smul.u32 16, %s24
      %p422 = scmp.lt.s32.totalorder %s421, 15
      %s423 = scalar_select %p422, %s421, 15
      %s424 = smul.addr %s423, 8
      %s425 = scalar_lea.vmem %s4, %s424
      %s426 = smul.u32 16, %s24
      %s427 = smul.u32 16, %s24
      %p428 = scmp.lt.s32.totalorder %s427, 15
      %s429 = scalar_select %p428, %s427, 15
      %s430 = smul.addr %s429, 8
      %s431 = scalar_lea.vmem %s5, %s430
      %s432 = smul.u32 16, %s24
      %s433 = smul.u32 16, %s24
      %p434 = scmp.lt.s32.totalorder %s433, 15
      %s435 = scalar_select %p434, %s433, 15
      %s436 = smul.addr %s435, 8
      %s437 = scalar_lea.vmem %s8, %s436
      %s438 = smul.u32 16, %s24
      %p440 = scmp.eq.s32.totalorder %s25, 0
      %p441 = scmp.eq.s32.totalorder %s26, 0
      %p442 = pnand %p440, %p441
      %p443 = pneg %p442
      // Predicated region
      $region53: #{forward.5} parent=51 // pred_check
        _
      $region54: #{forward.5} parent=51 // pred_check_branch
        %445 = sbr.rel (%p442) target = $region56
      $region55: #{forward.5} parent=51 // pred_region
        %446 = vst [vmem:[#allocation2] sm:$0xff] 0.0
        %447 = vst [vmem:[#allocation2 + $0x8] sm:$0xff] 0.0
        %448 = vst [vmem:[#allocation2 + $0x10] sm:$0xff] 0.0
        %449 = vst [vmem:[#allocation2 + $0x18] sm:$0xff] 0.0
        %450 = vst [vmem:[#allocation2 + $0x20] sm:$0xff] 0.0
        %451 = vst [vmem:[#allocation2 + $0x28] sm:$0xff] 0.0
        %452 = vst [vmem:[#allocation2 + $0x30] sm:$0xff] 0.0
        %453 = vst [vmem:[#allocation2 + $0x38] sm:$0xff] 0.0
        %454 = vst [vmem:[#allocation2 + $0x40] sm:$0xff] 0.0
        %455 = vst [vmem:[#allocation2 + $0x48] sm:$0xff] 0.0
        %456 = vst [vmem:[#allocation2 + $0x50] sm:$0xff] 0.0
        %457 = vst [vmem:[#allocation2 + $0x58] sm:$0xff] 0.0
        %458 = vst [vmem:[#allocation2 + $0x60] sm:$0xff] 0.0
        %459 = vst [vmem:[#allocation2 + $0x68] sm:$0xff] 0.0
        %460 = vst [vmem:[#allocation2 + $0x70] sm:$0xff] 0.0
        %461 = vst [vmem:[#allocation2 + $0x78] sm:$0xff] 0.0
      $region56: #{forward.5} parent=51 // pred_fallthru
        _
      %v462 = vld [vmem:[%s408] sm:$0xff]
      %v463 = vld [vmem:[%s408 + $0x8] sm:$0xff]
      %v464 = vld [vmem:[%s408 + $0x10] sm:$0xff]
      %v465 = vld [vmem:[%s408 + $0x18] sm:$0xff]
      %v466 = vunpack.c.l.s8.bf16 %v462
      %v467 = vunpack.c.h.s8.bf16 %v462
      %v468 = vunpack.c.l.s8.bf16 %v463
      %v469 = vunpack.c.h.s8.bf16 %v463
      %v470 = vunpack.c.l.s8.bf16 %v464
      %v471 = vunpack.c.h.s8.bf16 %v464
      %v472 = vunpack.c.l.s8.bf16 %v465
      %v473 = vunpack.c.h.s8.bf16 %v465
      %v474 = vld [vmem:[%s414] sm:$0xf]
      %v475 = vld [vmem:[%s414 + $0x4] sm:$0xf]
      %v476 = vld [vmem:[%s414 + $0x8] sm:$0xf]
      %v477 = vld [vmem:[%s414 + $0xc] sm:$0xf]
      %v478 = vld [vmem:[%s414 + $0x10] sm:$0xf]
      %v479 = vld [vmem:[%s414 + $0x14] sm:$0xf]
      %v480 = vld [vmem:[%s414 + $0x18] sm:$0xf]
      %v481 = vld [vmem:[%s414 + $0x1c] sm:$0xf]
      %v482 = vld [vmem:[%s414 + $0x20] sm:$0xf]
      %v483 = vld [vmem:[%s414 + $0x24] sm:$0xf]
      %v484 = vld [vmem:[%s414 + $0x28] sm:$0xf]
      %v485 = vld [vmem:[%s414 + $0x2c] sm:$0xf]
      %v486 = vld [vmem:[%s414 + $0x30] sm:$0xf]
      %v487 = vld [vmem:[%s414 + $0x34] sm:$0xf]
      %v488 = vld [vmem:[%s414 + $0x38] sm:$0xf]
      %v489 = vld [vmem:[%s414 + $0x3c] sm:$0xf]
      %v506 = vunpack.c.l.b16 %v474
      %v507 = vunpack.c.l.b16 %v475
      %v508 = vunpack.c.l.b16 %v476
      %v509 = vunpack.c.l.b16 %v477
      %v510 = vunpack.c.l.b16 %v478
      %v511 = vunpack.c.l.b16 %v479
      %v512 = vunpack.c.l.b16 %v480
      %v513 = vunpack.c.l.b16 %v481
      %v514 = vunpack.c.l.b16 %v482
      %v515 = vunpack.c.l.b16 %v483
      %v516 = vunpack.c.l.b16 %v484
      %v517 = vunpack.c.l.b16 %v485
      %v518 = vunpack.c.l.b16 %v486
      %v519 = vunpack.c.l.b16 %v487
      %v520 = vunpack.c.l.b16 %v488
      %v521 = vunpack.c.l.b16 %v489
      %v522 = vpack.c.b16 %v507, %v506
      %v523 = vpack.c.b16 %v509, %v508
      %v524 = vpack.c.b16 %v511, %v510
      %v525 = vpack.c.b16 %v513, %v512
      %v526 = vpack.c.b16 %v515, %v514
      %v527 = vpack.c.b16 %v517, %v516
      %v528 = vpack.c.b16 %v519, %v518
      %v529 = vpack.c.b16 %v521, %v520
      %538 = vmatprep.subr.bf16.mxu0 0
      %539 = vmatpush1.bf16.msra.mxu0 %v529
      %540 = vmatprep.subr.bf16.mxu0 0
      %541 = vmatpush1.bf16.msra.mxu0 %v528
      %542 = vmatprep.subr.bf16.mxu0 0
      %543 = vmatpush1.bf16.msra.mxu0 %v527
      %544 = vmatprep.subr.bf16.mxu0 0
      %545 = vmatpush1.bf16.msra.mxu0 %v526
      %546 = vmatprep.subr.bf16.mxu0 0
      %547 = vmatpush1.bf16.msra.mxu0 %v525
      %548 = vmatprep.subr.bf16.mxu0 0
      %549 = vmatpush1.bf16.msra.mxu0 %v524
      %550 = vmatprep.subr.bf16.mxu0 0
      %551 = vmatpush1.bf16.msra.mxu0 %v523
      %552 = vmatprep.subr.bf16.mxu0 0
      %553 = vmatpush1.bf16.msra.mxu0 %v522
      %554 = vmatprep.subr.bf16.mxu0 0
      %555 = vmatpush2.bf16.msra.mxu0 0
      %556 = vmatprep.subr.bf16.mxu0 0
      %557 = vmatpush2.bf16.msra.mxu0 0
      %558 = vmatprep.subr.bf16.mxu0 0
      %559 = vmatpush2.bf16.msra.mxu0 0
      %560 = vmatprep.subr.bf16.mxu0 0
      %561 = vmatpush2.bf16.msra.mxu0 0
      %562 = vmatprep.subr.bf16.mxu0 0
      %563 = vmatpush2.bf16.msra.mxu0 0
      %564 = vmatprep.subr.bf16.mxu0 0
      %565 = vmatpush2.bf16.msra.mxu0 0
      %566 = vmatprep.subr.bf16.mxu0 0
      %567 = vmatpush2.bf16.msra.mxu0 0
      %568 = vmatprep.subr.bf16.mxu0 0
      %569 = vmatpush2.bf16.msra.mxu0 0
      %570 = vmatprep.mubr.bf16.mxu0 0
      %571 = vmatmul.mubr.bf16.gmra.mxu0 %v466
      %v572 = vpop.f32.mrf.mxu0
      %v573 = vadd.f32 0.0, %v572
      %v574 = vpop.f32.mrf.mxu0
      %v575 = vpop.f32.mrf.mxu0
      %v576 = vadd.f32 0.0, %v575
      %v577 = vpop.f32.mrf.mxu0
      %578 = vmatprep.mubr.bf16.mxu0 0
      %579 = vmatmul.mubr.bf16.gmra.mxu0 %v467
      %v580 = vpop.f32.mrf.mxu0
      %v581 = vadd.f32 0.0, %v580
      %v582 = vpop.f32.mrf.mxu0
      %v583 = vpop.f32.mrf.mxu0
      %v584 = vadd.f32 0.0, %v583
      %v585 = vpop.f32.mrf.mxu0
      %586 = vmatprep.mubr.bf16.mxu0 0
      %587 = vmatmul.mubr.bf16.gmra.mxu0 %v468
      %v588 = vpop.f32.mrf.mxu0
      %v589 = vadd.f32 0.0, %v588
      %v590 = vpop.f32.mrf.mxu0
      %v591 = vpop.f32.mrf.mxu0
      %v592 = vadd.f32 0.0, %v591
      %v593 = vpop.f32.mrf.mxu0
      %594 = vmatprep.mubr.bf16.mxu0 0
      %595 = vmatmul.mubr.bf16.gmra.mxu0 %v469
      %v596 = vpop.f32.mrf.mxu0
      %v597 = vadd.f32 0.0, %v596
      %v598 = vpop.f32.mrf.mxu0
      %v599 = vpop.f32.mrf.mxu0
      %v600 = vadd.f32 0.0, %v599
      %v601 = vpop.f32.mrf.mxu0
      %602 = vmatprep.mubr.bf16.mxu0 0
      %603 = vmatmul.mubr.bf16.gmra.mxu0 %v470
      %v604 = vpop.f32.mrf.mxu0
      %v605 = vadd.f32 0.0, %v604
      %v606 = vpop.f32.mrf.mxu0
      %v607 = vpop.f32.mrf.mxu0
      %v608 = vadd.f32 0.0, %v607
      %v609 = vpop.f32.mrf.mxu0
      %610 = vmatprep.mubr.bf16.mxu0 0
      %611 = vmatmul.mubr.bf16.gmra.mxu0 %v471
      %v612 = vpop.f32.mrf.mxu0
      %v613 = vadd.f32 0.0, %v612
      %v614 = vpop.f32.mrf.mxu0
      %v615 = vpop.f32.mrf.mxu0
      %v616 = vadd.f32 0.0, %v615
      %v617 = vpop.f32.mrf.mxu0
      %618 = vmatprep.mubr.bf16.mxu0 0
      %619 = vmatmul.mubr.bf16.gmra.mxu0 %v472
      %v620 = vpop.f32.mrf.mxu0
      %v621 = vadd.f32 0.0, %v620
      %v622 = vpop.f32.mrf.mxu0
      %v623 = vpop.f32.mrf.mxu0
      %v624 = vadd.f32 0.0, %v623
      %v625 = vpop.f32.mrf.mxu0
      %626 = vmatprep.mubr.bf16.mxu0 0
      %627 = vmatmul.mubr.bf16.gmra.mxu0 %v473
      %v628 = vpop.f32.mrf.mxu0
      %v629 = vadd.f32 0.0, %v628
      %v630 = vpop.f32.mrf.mxu0
      %v631 = vpop.f32.mrf.mxu0
      %v632 = vadd.f32 0.0, %v631
      %v633 = vpop.f32.mrf.mxu0
      %634 = vdwg.mxu0
      %v635 = vld [vmem:[#allocation2] sm:$0xff]
      %v636 = vld [vmem:[#allocation2 + $0x8] sm:$0xff]
      %v637 = vld [vmem:[#allocation2 + $0x10] sm:$0xff]
      %v638 = vld [vmem:[#allocation2 + $0x18] sm:$0xff]
      %v639 = vld [vmem:[#allocation2 + $0x20] sm:$0xff]
      %v640 = vld [vmem:[#allocation2 + $0x28] sm:$0xff]
      %v641 = vld [vmem:[#allocation2 + $0x30] sm:$0xff]
      %v642 = vld [vmem:[#allocation2 + $0x38] sm:$0xff]
      %v643 = vld [vmem:[#allocation2 + $0x40] sm:$0xff]
      %v644 = vld [vmem:[#allocation2 + $0x48] sm:$0xff]
      %v645 = vld [vmem:[#allocation2 + $0x50] sm:$0xff]
      %v646 = vld [vmem:[#allocation2 + $0x58] sm:$0xff]
      %v647 = vld [vmem:[#allocation2 + $0x60] sm:$0xff]
      %v648 = vld [vmem:[#allocation2 + $0x68] sm:$0xff]
      %v649 = vld [vmem:[#allocation2 + $0x70] sm:$0xff]
      %v650 = vld [vmem:[#allocation2 + $0x78] sm:$0xff]
      %v651 = vpack.c.bf16 %v576, %v573
      %v652 = vpack.c.bf16 %v584, %v581
      %v653 = vpack.c.bf16 %v592, %v589
      %v654 = vpack.c.bf16 %v600, %v597
      %v655 = vpack.c.bf16 %v608, %v605
      %v656 = vpack.c.bf16 %v616, %v613
      %v657 = vpack.c.bf16 %v624, %v621
      %v658 = vpack.c.bf16 %v632, %v629
      %v659 = vld [vmem:[%s420] sm:$0xf]
      %v660 = vld [vmem:[%s420 + $0x4] sm:$0xf]
      %v661 = vld [vmem:[%s420 + $0x8] sm:$0xf]
      %v662 = vld [vmem:[%s420 + $0xc] sm:$0xf]
      %v663 = vld [vmem:[%s420 + $0x10] sm:$0xf]
      %v664 = vld [vmem:[%s420 + $0x14] sm:$0xf]
      %v665 = vld [vmem:[%s420 + $0x18] sm:$0xf]
      %v666 = vld [vmem:[%s420 + $0x1c] sm:$0xf]
      %v667 = vld [vmem:[%s420 + $0x20] sm:$0xf]
      %v668 = vld [vmem:[%s420 + $0x24] sm:$0xf]
      %v669 = vld [vmem:[%s420 + $0x28] sm:$0xf]
      %v670 = vld [vmem:[%s420 + $0x2c] sm:$0xf]
      %v671 = vld [vmem:[%s420 + $0x30] sm:$0xf]
      %v672 = vld [vmem:[%s420 + $0x34] sm:$0xf]
      %v673 = vld [vmem:[%s420 + $0x38] sm:$0xf]
      %v674 = vld [vmem:[%s420 + $0x3c] sm:$0xf]
      %v691 = vunpack.c.l.b16 %v659
      %v692 = vunpack.c.l.b16 %v660
      %v693 = vunpack.c.l.b16 %v661
      %v694 = vunpack.c.l.b16 %v662
      %v695 = vunpack.c.l.b16 %v663
      %v696 = vunpack.c.l.b16 %v664
      %v697 = vunpack.c.l.b16 %v665
      %v698 = vunpack.c.l.b16 %v666
      %v699 = vunpack.c.l.b16 %v667
      %v700 = vunpack.c.l.b16 %v668
      %v701 = vunpack.c.l.b16 %v669
      %v702 = vunpack.c.l.b16 %v670
      %v703 = vunpack.c.l.b16 %v671
      %v704 = vunpack.c.l.b16 %v672
      %v705 = vunpack.c.l.b16 %v673
      %v706 = vunpack.c.l.b16 %v674
      %v707 = vpack.c.b16 %v692, %v691
      %v708 = vpack.c.b16 %v694, %v693
      %v709 = vpack.c.b16 %v696, %v695
      %v710 = vpack.c.b16 %v698, %v697
      %v711 = vpack.c.b16 %v700, %v699
      %v712 = vpack.c.b16 %v702, %v701
      %v713 = vpack.c.b16 %v704, %v703
      %v714 = vpack.c.b16 %v706, %v705
      %723 = vmatprep.subr.bf16.mxu0 0
      %724 = vmatpush1.bf16.msra.mxu0 %v714
      %725 = vmatprep.subr.bf16.mxu0 0
      %726 = vmatpush1.bf16.msra.mxu0 %v713
      %727 = vmatprep.subr.bf16.mxu0 0
      %728 = vmatpush1.bf16.msra.mxu0 %v712
      %729 = vmatprep.subr.bf16.mxu0 0
      %730 = vmatpush1.bf16.msra.mxu0 %v711
      %731 = vmatprep.subr.bf16.mxu0 0
      %732 = vmatpush1.bf16.msra.mxu0 %v710
      %733 = vmatprep.subr.bf16.mxu0 0
      %734 = vmatpush1.bf16.msra.mxu0 %v709
      %735 = vmatprep.subr.bf16.mxu0 0
      %736 = vmatpush1.bf16.msra.mxu0 %v708
      %737 = vmatprep.subr.bf16.mxu0 0
      %738 = vmatpush1.bf16.msra.mxu0 %v707
      %739 = vmatprep.subr.bf16.mxu0 0
      %740 = vmatpush2.bf16.msra.mxu0 0
      %741 = vmatprep.subr.bf16.mxu0 0
      %742 = vmatpush2.bf16.msra.mxu0 0
      %743 = vmatprep.subr.bf16.mxu0 0
      %744 = vmatpush2.bf16.msra.mxu0 0
      %745 = vmatprep.subr.bf16.mxu0 0
      %746 = vmatpush2.bf16.msra.mxu0 0
      %747 = vmatprep.subr.bf16.mxu0 0
      %748 = vmatpush2.bf16.msra.mxu0 0
      %749 = vmatprep.subr.bf16.mxu0 0
      %750 = vmatpush2.bf16.msra.mxu0 0
      %751 = vmatprep.subr.bf16.mxu0 0
      %752 = vmatpush2.bf16.msra.mxu0 0
      %753 = vmatprep.subr.bf16.mxu0 0
      %754 = vmatpush2.bf16.msra.mxu0 0
      %755 = vmatprep.mubr.bf16.mxu0 0
      %756 = vmatmul.mubr.bf16.gmra.mxu0 %v651
      %v757 = vpop.f32.mrf.mxu0
      %v758 = vadd.f32 0.0, %v757
      %v759 = vpop.f32.mrf.mxu0
      %v760 = vpop.f32.mrf.mxu0
      %v761 = vadd.f32 0.0, %v760
      %v762 = vpop.f32.mrf.mxu0
      %763 = vmatprep.mubr.bf16.mxu0 0
      %764 = vmatmul.mubr.bf16.gmra.mxu0 %v652
      %v765 = vpop.f32.mrf.mxu0
      %v766 = vadd.f32 0.0, %v765
      %v767 = vpop.f32.mrf.mxu0
      %v768 = vpop.f32.mrf.mxu0
      %v769 = vadd.f32 0.0, %v768
      %v770 = vpop.f32.mrf.mxu0
      %771 = vmatprep.mubr.bf16.mxu0 0
      %772 = vmatmul.mubr.bf16.gmra.mxu0 %v653
      %v773 = vpop.f32.mrf.mxu0
      %v774 = vadd.f32 0.0, %v773
      %v775 = vpop.f32.mrf.mxu0
      %v776 = vpop.f32.mrf.mxu0
      %v777 = vadd.f32 0.0, %v776
      %v778 = vpop.f32.mrf.mxu0
      %779 = vmatprep.mubr.bf16.mxu0 0
      %780 = vmatmul.mubr.bf16.gmra.mxu0 %v654
      %v781 = vpop.f32.mrf.mxu0
      %v782 = vadd.f32 0.0, %v781
      %v783 = vpop.f32.mrf.mxu0
      %v784 = vpop.f32.mrf.mxu0
      %v785 = vadd.f32 0.0, %v784
      %v786 = vpop.f32.mrf.mxu0
      %787 = vmatprep.mubr.bf16.mxu0 0
      %788 = vmatmul.mubr.bf16.gmra.mxu0 %v655
      %v789 = vpop.f32.mrf.mxu0
      %v790 = vadd.f32 0.0, %v789
      %v791 = vpop.f32.mrf.mxu0
      %v792 = vpop.f32.mrf.mxu0
      %v793 = vadd.f32 0.0, %v792
      %v794 = vpop.f32.mrf.mxu0
      %795 = vmatprep.mubr.bf16.mxu0 0
      %796 = vmatmul.mubr.bf16.gmra.mxu0 %v656
      %v797 = vpop.f32.mrf.mxu0
      %v798 = vadd.f32 0.0, %v797
      %v799 = vpop.f32.mrf.mxu0
      %v800 = vpop.f32.mrf.mxu0
      %v801 = vadd.f32 0.0, %v800
      %v802 = vpop.f32.mrf.mxu0
      %803 = vmatprep.mubr.bf16.mxu0 0
      %804 = vmatmul.mubr.bf16.gmra.mxu0 %v657
      %v805 = vpop.f32.mrf.mxu0
      %v806 = vadd.f32 0.0, %v805
      %v807 = vpop.f32.mrf.mxu0
      %v808 = vpop.f32.mrf.mxu0
      %v809 = vadd.f32 0.0, %v808
      %v810 = vpop.f32.mrf.mxu0
      %811 = vmatprep.mubr.bf16.mxu0 0
      %812 = vmatmul.mubr.bf16.gmra.mxu0 %v658
      %v813 = vpop.f32.mrf.mxu0
      %v814 = vadd.f32 0.0, %v813
      %v815 = vpop.f32.mrf.mxu0
      %v816 = vpop.f32.mrf.mxu0
      %v817 = vadd.f32 0.0, %v816
      %v818 = vpop.f32.mrf.mxu0
      %819 = vdwg.mxu0
      %v820 = vadd.f32 %v635, %v758
      %v821 = vadd.f32 %v636, %v761
      %v822 = vadd.f32 %v637, %v766
      %v823 = vadd.f32 %v638, %v769
      %v824 = vadd.f32 %v639, %v774
      %v825 = vadd.f32 %v640, %v777
      %v826 = vadd.f32 %v641, %v782
      %v827 = vadd.f32 %v642, %v785
      %v828 = vadd.f32 %v643, %v790
      %v829 = vadd.f32 %v644, %v793
      %v830 = vadd.f32 %v645, %v798
      %v831 = vadd.f32 %v646, %v801
      %v832 = vadd.f32 %v647, %v806
      %v833 = vadd.f32 %v648, %v809
      %v834 = vadd.f32 %v649, %v814
      %v835 = vadd.f32 %v650, %v817
      %836 = vst [vmem:[#allocation2] sm:$0xff] %v820
      %837 = vst [vmem:[#allocation2 + $0x8] sm:$0xff] %v821
      %838 = vst [vmem:[#allocation2 + $0x10] sm:$0xff] %v822
      %839 = vst [vmem:[#allocation2 + $0x18] sm:$0xff] %v823
      %840 = vst [vmem:[#allocation2 + $0x20] sm:$0xff] %v824
      %841 = vst [vmem:[#allocation2 + $0x28] sm:$0xff] %v825
      %842 = vst [vmem:[#allocation2 + $0x30] sm:$0xff] %v826
      %843 = vst [vmem:[#allocation2 + $0x38] sm:$0xff] %v827
      %844 = vst [vmem:[#allocation2 + $0x40] sm:$0xff] %v828
      %845 = vst [vmem:[#allocation2 + $0x48] sm:$0xff] %v829
      %846 = vst [vmem:[#allocation2 + $0x50] sm:$0xff] %v830
      %847 = vst [vmem:[#allocation2 + $0x58] sm:$0xff] %v831
      %848 = vst [vmem:[#allocation2 + $0x60] sm:$0xff] %v832
      %849 = vst [vmem:[#allocation2 + $0x68] sm:$0xff] %v833
      %850 = vst [vmem:[#allocation2 + $0x70] sm:$0xff] %v834
      %851 = vst [vmem:[#allocation2 + $0x78] sm:$0xff] %v835
      %p852 = scmp.eq.s32.totalorder %s26, 8
      %p853 = pnand %p440, %p852
      %p854 = pneg %p853
      // Predicated region
      $region57: #{forward.5} parent=51 // pred_check
        _
      $region58: #{forward.5} parent=51 // pred_check_branch
        %856 = sbr.rel (%p853) target = $region60
      $region59: #{forward.5} parent=51 // pred_region
        %v857 = vld [vmem:[#allocation2] sm:$0xff]
        %v858 = vld [vmem:[#allocation2 + $0x8] sm:$0xff]
        %v859 = vld [vmem:[#allocation2 + $0x10] sm:$0xff]
        %v860 = vld [vmem:[#allocation2 + $0x18] sm:$0xff]
        %v861 = vld [vmem:[#allocation2 + $0x20] sm:$0xff]
        %v862 = vld [vmem:[#allocation2 + $0x28] sm:$0xff]
        %v863 = vld [vmem:[#allocation2 + $0x30] sm:$0xff]
        %v864 = vld [vmem:[#allocation2 + $0x38] sm:$0xff]
        %v865 = vld [vmem:[#allocation2 + $0x40] sm:$0xff]
        %v866 = vld [vmem:[#allocation2 + $0x48] sm:$0xff]
        %v867 = vld [vmem:[#allocation2 + $0x50] sm:$0xff]
        %v868 = vld [vmem:[#allocation2 + $0x58] sm:$0xff]
        %v869 = vld [vmem:[#allocation2 + $0x60] sm:$0xff]
        %v870 = vld [vmem:[#allocation2 + $0x68] sm:$0xff]
        %v871 = vld [vmem:[#allocation2 + $0x70] sm:$0xff]
        %v872 = vld [vmem:[#allocation2 + $0x78] sm:$0xff]
        %v873 = vld [vmem:[%s425] sm:$0xff]
        %v874 = vld [vmem:[%s425 + $0x8] sm:$0xff]
        %v875 = vld [vmem:[%s425 + $0x10] sm:$0xff]
        %v876 = vld [vmem:[%s425 + $0x18] sm:$0xff]
        %v877 = vld [vmem:[%s425 + $0x20] sm:$0xff]
        %v878 = vld [vmem:[%s425 + $0x28] sm:$0xff]
        %v879 = vld [vmem:[%s425 + $0x30] sm:$0xff]
        %v880 = vld [vmem:[%s425 + $0x38] sm:$0xff]
        %v881 = vld [vmem:[%s425 + $0x40] sm:$0xff]
        %v882 = vld [vmem:[%s425 + $0x48] sm:$0xff]
        %v883 = vld [vmem:[%s425 + $0x50] sm:$0xff]
        %v884 = vld [vmem:[%s425 + $0x58] sm:$0xff]
        %v885 = vld [vmem:[%s425 + $0x60] sm:$0xff]
        %v886 = vld [vmem:[%s425 + $0x68] sm:$0xff]
        %v887 = vld [vmem:[%s425 + $0x70] sm:$0xff]
        %v888 = vld [vmem:[%s425 + $0x78] sm:$0xff]
        %890 = vset.pattern.permute.xlu0 0
        %891 = vperm.xlu0 %890, %v873
        %v892 = vpop.permute.xlu0 %891
        %895 = vset.pattern.permute.xlu0 0
        %896 = vperm.xlu0 %895, %v874
        %v897 = vpop.permute.xlu0 %896
        %900 = vset.pattern.permute.xlu0 0
        %901 = vperm.xlu0 %900, %v875
        %v902 = vpop.permute.xlu0 %901
        %905 = vset.pattern.permute.xlu0 0
        %906 = vperm.xlu0 %905, %v876
        %v907 = vpop.permute.xlu0 %906
        %910 = vset.pattern.permute.xlu0 0
        %911 = vperm.xlu0 %910, %v877
        %v912 = vpop.permute.xlu0 %911
        %915 = vset.pattern.permute.xlu0 0
        %916 = vperm.xlu0 %915, %v878
        %v917 = vpop.permute.xlu0 %916
        %920 = vset.pattern.permute.xlu0 0
        %921 = vperm.xlu0 %920, %v879
        %v922 = vpop.permute.xlu0 %921
        %925 = vset.pattern.permute.xlu0 0
        %926 = vperm.xlu0 %925, %v880
        %v927 = vpop.permute.xlu0 %926
        %930 = vset.pattern.permute.xlu0 0
        %931 = vperm.xlu0 %930, %v881
        %v932 = vpop.permute.xlu0 %931
        %935 = vset.pattern.permute.xlu0 0
        %936 = vperm.xlu0 %935, %v882
        %v937 = vpop.permute.xlu0 %936
        %940 = vset.pattern.permute.xlu0 0
        %941 = vperm.xlu0 %940, %v883
        %v942 = vpop.permute.xlu0 %941
        %945 = vset.pattern.permute.xlu0 0
        %946 = vperm.xlu0 %945, %v884
        %v947 = vpop.permute.xlu0 %946
        %950 = vset.pattern.permute.xlu0 0
        %951 = vperm.xlu0 %950, %v885
        %v952 = vpop.permute.xlu0 %951
        %955 = vset.pattern.permute.xlu0 0
        %956 = vperm.xlu0 %955, %v886
        %v957 = vpop.permute.xlu0 %956
        %960 = vset.pattern.permute.xlu0 0
        %961 = vperm.xlu0 %960, %v887
        %v962 = vpop.permute.xlu0 %961
        %965 = vset.pattern.permute.xlu0 0
        %966 = vperm.xlu0 %965, %v888
        %v967 = vpop.permute.xlu0 %966
        %v969 = vmul.f32 %v857, %v892
        %v970 = vmul.f32 %v858, %v897
        %v971 = vmul.f32 %v859, %v902
        %v972 = vmul.f32 %v860, %v907
        %v973 = vmul.f32 %v861, %v912
        %v974 = vmul.f32 %v862, %v917
        %v975 = vmul.f32 %v863, %v922
        %v976 = vmul.f32 %v864, %v927
        %v977 = vmul.f32 %v865, %v932
        %v978 = vmul.f32 %v866, %v937
        %v979 = vmul.f32 %v867, %v942
        %v980 = vmul.f32 %v868, %v947
        %v981 = vmul.f32 %v869, %v952
        %v982 = vmul.f32 %v870, %v957
        %v983 = vmul.f32 %v871, %v962
        %v984 = vmul.f32 %v872, %v967
        %v985 = vld [vmem:[%s3] sm:$0x1]
        %v987 = vlaneseq
        %v988 = vshrl.u32 %v987, 7
        %v989 = vsub.s32 0, %v988
        %v990 = vrot.slane %v985, %v989
        %v992 = vadd.f32 %v969, %v990
        %v993 = vadd.f32 %v970, %v990
        %v994 = vadd.f32 %v971, %v990
        %v995 = vadd.f32 %v972, %v990
        %v996 = vadd.f32 %v973, %v990
        %v997 = vadd.f32 %v974, %v990
        %v998 = vadd.f32 %v975, %v990
        %v999 = vadd.f32 %v976, %v990
        %v1000 = vadd.f32 %v977, %v990
        %v1001 = vadd.f32 %v978, %v990
        %v1002 = vadd.f32 %v979, %v990
        %v1003 = vadd.f32 %v980, %v990
        %v1004 = vadd.f32 %v981, %v990
        %v1005 = vadd.f32 %v982, %v990
        %v1006 = vadd.f32 %v983, %v990
        %v1007 = vadd.f32 %v984, %v990
        %v1008 = vpack.c.bf16 %v993, %v992
        %v1009 = vpack.c.bf16 %v995, %v994
        %v1010 = vpack.c.bf16 %v997, %v996
        %v1011 = vpack.c.bf16 %v999, %v998
        %v1012 = vpack.c.bf16 %v1001, %v1000
        %v1013 = vpack.c.bf16 %v1003, %v1002
        %v1014 = vpack.c.bf16 %v1005, %v1004
        %v1015 = vpack.c.bf16 %v1007, %v1006
        %v1016 = vld [vmem:[%s431] sm:$0xff]
        %v1017 = vld [vmem:[%s431 + $0x8] sm:$0xff]
        %v1018 = vld [vmem:[%s431 + $0x10] sm:$0xff]
        %v1019 = vld [vmem:[%s431 + $0x18] sm:$0xff]
        %v1020 = vld [vmem:[%s431 + $0x20] sm:$0xff]
        %v1021 = vld [vmem:[%s431 + $0x28] sm:$0xff]
        %v1022 = vld [vmem:[%s431 + $0x30] sm:$0xff]
        %v1023 = vld [vmem:[%s431 + $0x38] sm:$0xff]
        %v1024 = vld [vmem:[%s431 + $0x40] sm:$0xff]
        %v1025 = vld [vmem:[%s431 + $0x48] sm:$0xff]
        %v1026 = vld [vmem:[%s431 + $0x50] sm:$0xff]
        %v1027 = vld [vmem:[%s431 + $0x58] sm:$0xff]
        %v1028 = vld [vmem:[%s431 + $0x60] sm:$0xff]
        %v1029 = vld [vmem:[%s431 + $0x68] sm:$0xff]
        %v1030 = vld [vmem:[%s431 + $0x70] sm:$0xff]
        %v1031 = vld [vmem:[%s431 + $0x78] sm:$0xff]
        %v1032 = vld [vmem:[%s6] sm:$0xf]
        %v1033 = vld [vmem:[%s6 + $0x4] sm:$0xf]
        %v1034 = vld [vmem:[%s6 + $0x8] sm:$0xf]
        %v1035 = vld [vmem:[%s6 + $0xc] sm:$0xf]
        %v1036 = vld [vmem:[%s6 + $0x10] sm:$0xf]
        %v1037 = vld [vmem:[%s6 + $0x14] sm:$0xf]
        %v1038 = vld [vmem:[%s6 + $0x18] sm:$0xf]
        %v1039 = vld [vmem:[%s6 + $0x1c] sm:$0xf]
        %v1040 = vld [vmem:[%s6 + $0x20] sm:$0xf]
        %v1041 = vld [vmem:[%s6 + $0x24] sm:$0xf]
        %v1042 = vld [vmem:[%s6 + $0x28] sm:$0xf]
        %v1043 = vld [vmem:[%s6 + $0x2c] sm:$0xf]
        %v1044 = vld [vmem:[%s6 + $0x30] sm:$0xf]
        %v1045 = vld [vmem:[%s6 + $0x34] sm:$0xf]
        %v1046 = vld [vmem:[%s6 + $0x38] sm:$0xf]
        %v1047 = vld [vmem:[%s6 + $0x3c] sm:$0xf]
        %v1064 = vunpack.c.l.b16 %v1032
        %v1065 = vunpack.c.l.b16 %v1033
        %v1066 = vunpack.c.l.b16 %v1034
        %v1067 = vunpack.c.l.b16 %v1035
        %v1068 = vunpack.c.l.b16 %v1036
        %v1069 = vunpack.c.l.b16 %v1037
        %v1070 = vunpack.c.l.b16 %v1038
        %v1071 = vunpack.c.l.b16 %v1039
        %v1072 = vunpack.c.l.b16 %v1040
        %v1073 = vunpack.c.l.b16 %v1041
        %v1074 = vunpack.c.l.b16 %v1042
        %v1075 = vunpack.c.l.b16 %v1043
        %v1076 = vunpack.c.l.b16 %v1044
        %v1077 = vunpack.c.l.b16 %v1045
        %v1078 = vunpack.c.l.b16 %v1046
        %v1079 = vunpack.c.l.b16 %v1047
        %v1080 = vpack.c.b16 %v1065, %v1064
        %v1081 = vpack.c.b16 %v1067, %v1066
        %v1082 = vpack.c.b16 %v1069, %v1068
        %v1083 = vpack.c.b16 %v1071, %v1070
        %v1084 = vpack.c.b16 %v1073, %v1072
        %v1085 = vpack.c.b16 %v1075, %v1074
        %v1086 = vpack.c.b16 %v1077, %v1076
        %v1087 = vpack.c.b16 %v1079, %v1078
        %1096 = vmatprep.subr.bf16.mxu0 0
        %1097 = vmatpush1.bf16.msra.mxu0 %v1087
        %1098 = vmatprep.subr.bf16.mxu0 0
        %1099 = vmatpush1.bf16.msra.mxu0 %v1086
        %1100 = vmatprep.subr.bf16.mxu0 0
        %1101 = vmatpush1.bf16.msra.mxu0 %v1085
        %1102 = vmatprep.subr.bf16.mxu0 0
        %1103 = vmatpush1.bf16.msra.mxu0 %v1084
        %1104 = vmatprep.subr.bf16.mxu0 0
        %1105 = vmatpush1.bf16.msra.mxu0 %v1083
        %1106 = vmatprep.subr.bf16.mxu0 0
        %1107 = vmatpush1.bf16.msra.mxu0 %v1082
        %1108 = vmatprep.subr.bf16.mxu0 0
        %1109 = vmatpush1.bf16.msra.mxu0 %v1081
        %1110 = vmatprep.subr.bf16.mxu0 0
        %1111 = vmatpush1.bf16.msra.mxu0 %v1080
        %1112 = vmatprep.subr.bf16.mxu0 0
        %1113 = vmatpush2.bf16.msra.mxu0 0
        %1114 = vmatprep.subr.bf16.mxu0 0
        %1115 = vmatpush2.bf16.msra.mxu0 0
        %1116 = vmatprep.subr.bf16.mxu0 0
        %1117 = vmatpush2.bf16.msra.mxu0 0
        %1118 = vmatprep.subr.bf16.mxu0 0
        %1119 = vmatpush2.bf16.msra.mxu0 0
        %1120 = vmatprep.subr.bf16.mxu0 0
        %1121 = vmatpush2.bf16.msra.mxu0 0
        %1122 = vmatprep.subr.bf16.mxu0 0
        %1123 = vmatpush2.bf16.msra.mxu0 0
        %1124 = vmatprep.subr.bf16.mxu0 0
        %1125 = vmatpush2.bf16.msra.mxu0 0
        %1126 = vmatprep.subr.bf16.mxu0 0
        %1127 = vmatpush2.bf16.msra.mxu0 0
        %1128 = vmatprep.mubr.bf16.mxu0 0
        %1129 = vmatmul.mubr.bf16.gmra.mxu0 %v1008
        %v1130 = vpop.f32.mrf.mxu0
        %v1131 = vadd.f32 0.0, %v1130
        %v1132 = vpop.f32.mrf.mxu0
        %v1133 = vpop.f32.mrf.mxu0
        %v1134 = vadd.f32 0.0, %v1133
        %v1135 = vpop.f32.mrf.mxu0
        %1136 = vmatprep.mubr.bf16.mxu0 0
        %1137 = vmatmul.mubr.bf16.gmra.mxu0 %v1009
        %v1138 = vpop.f32.mrf.mxu0
        %v1139 = vadd.f32 0.0, %v1138
        %v1140 = vpop.f32.mrf.mxu0
        %v1141 = vpop.f32.mrf.mxu0
        %v1142 = vadd.f32 0.0, %v1141
        %v1143 = vpop.f32.mrf.mxu0
        %1144 = vmatprep.mubr.bf16.mxu0 0
        %1145 = vmatmul.mubr.bf16.gmra.mxu0 %v1010
        %v1146 = vpop.f32.mrf.mxu0
        %v1147 = vadd.f32 0.0, %v1146
        %v1148 = vpop.f32.mrf.mxu0
        %v1149 = vpop.f32.mrf.mxu0
        %v1150 = vadd.f32 0.0, %v1149
        %v1151 = vpop.f32.mrf.mxu0
        %1152 = vmatprep.mubr.bf16.mxu0 0
        %1153 = vmatmul.mubr.bf16.gmra.mxu0 %v1011
        %v1154 = vpop.f32.mrf.mxu0
        %v1155 = vadd.f32 0.0, %v1154
        %v1156 = vpop.f32.mrf.mxu0
        %v1157 = vpop.f32.mrf.mxu0
        %v1158 = vadd.f32 0.0, %v1157
        %v1159 = vpop.f32.mrf.mxu0
        %1160 = vmatprep.mubr.bf16.mxu0 0
        %1161 = vmatmul.mubr.bf16.gmra.mxu0 %v1012
        %v1162 = vpop.f32.mrf.mxu0
        %v1163 = vadd.f32 0.0, %v1162
        %v1164 = vpop.f32.mrf.mxu0
        %v1165 = vpop.f32.mrf.mxu0
        %v1166 = vadd.f32 0.0, %v1165
        %v1167 = vpop.f32.mrf.mxu0
        %1168 = vmatprep.mubr.bf16.mxu0 0
        %1169 = vmatmul.mubr.bf16.gmra.mxu0 %v1013
        %v1170 = vpop.f32.mrf.mxu0
        %v1171 = vadd.f32 0.0, %v1170
        %v1172 = vpop.f32.mrf.mxu0
        %v1173 = vpop.f32.mrf.mxu0
        %v1174 = vadd.f32 0.0, %v1173
        %v1175 = vpop.f32.mrf.mxu0
        %1176 = vmatprep.mubr.bf16.mxu0 0
        %1177 = vmatmul.mubr.bf16.gmra.mxu0 %v1014
        %v1178 = vpop.f32.mrf.mxu0
        %v1179 = vadd.f32 0.0, %v1178
        %v1180 = vpop.f32.mrf.mxu0
        %v1181 = vpop.f32.mrf.mxu0
        %v1182 = vadd.f32 0.0, %v1181
        %v1183 = vpop.f32.mrf.mxu0
        %1184 = vmatprep.mubr.bf16.mxu0 0
        %1185 = vmatmul.mubr.bf16.gmra.mxu0 %v1015
        %v1186 = vpop.f32.mrf.mxu0
        %v1187 = vadd.f32 0.0, %v1186
        %v1188 = vpop.f32.mrf.mxu0
        %v1189 = vpop.f32.mrf.mxu0
        %v1190 = vadd.f32 0.0, %v1189
        %v1191 = vpop.f32.mrf.mxu0
        %1192 = vdwg.mxu0
        %v1193 = vadd.f32 %v1016, %v1131
        %v1194 = vadd.f32 %v1017, %v1134
        %v1195 = vadd.f32 %v1018, %v1139
        %v1196 = vadd.f32 %v1019, %v1142
        %v1197 = vadd.f32 %v1020, %v1147
        %v1198 = vadd.f32 %v1021, %v1150
        %v1199 = vadd.f32 %v1022, %v1155
        %v1200 = vadd.f32 %v1023, %v1158
        %v1201 = vadd.f32 %v1024, %v1163
        %v1202 = vadd.f32 %v1025, %v1166
        %v1203 = vadd.f32 %v1026, %v1171
        %v1204 = vadd.f32 %v1027, %v1174
        %v1205 = vadd.f32 %v1028, %v1179
        %v1206 = vadd.f32 %v1029, %v1182
        %v1207 = vadd.f32 %v1030, %v1187
        %v1208 = vadd.f32 %v1031, %v1190
        %v1209 = vld [vmem:[%s7] sm:$0x1]
        %v1211 = vlaneseq
        %v1212 = vshrl.u32 %v1211, 7
        %v1213 = vsub.s32 0, %v1212
        %v1214 = vrot.slane %v1209, %v1213
        %v1216 = vadd.f32 %v1193, %v1214
        %v1217 = vadd.f32 %v1194, %v1214
        %v1218 = vadd.f32 %v1195, %v1214
        %v1219 = vadd.f32 %v1196, %v1214
        %v1220 = vadd.f32 %v1197, %v1214
        %v1221 = vadd.f32 %v1198, %v1214
        %v1222 = vadd.f32 %v1199, %v1214
        %v1223 = vadd.f32 %v1200, %v1214
        %v1224 = vadd.f32 %v1201, %v1214
        %v1225 = vadd.f32 %v1202, %v1214
        %v1226 = vadd.f32 %v1203, %v1214
        %v1227 = vadd.f32 %v1204, %v1214
        %v1228 = vadd.f32 %v1205, %v1214
        %v1229 = vadd.f32 %v1206, %v1214
        %v1230 = vadd.f32 %v1207, %v1214
        %v1231 = vadd.f32 %v1208, %v1214
        %1232 = vst [vmem:[%s437] sm:$0xff] %v1216
        %1233 = vst [vmem:[%s437 + $0x8] sm:$0xff] %v1217
        %1234 = vst [vmem:[%s437 + $0x10] sm:$0xff] %v1218
        %1235 = vst [vmem:[%s437 + $0x18] sm:$0xff] %v1219
        %1236 = vst [vmem:[%s437 + $0x20] sm:$0xff] %v1220
        %1237 = vst [vmem:[%s437 + $0x28] sm:$0xff] %v1221
        %1238 = vst [vmem:[%s437 + $0x30] sm:$0xff] %v1222
        %1239 = vst [vmem:[%s437 + $0x38] sm:$0xff] %v1223
        %1240 = vst [vmem:[%s437 + $0x40] sm:$0xff] %v1224
        %1241 = vst [vmem:[%s437 + $0x48] sm:$0xff] %v1225
        %1242 = vst [vmem:[%s437 + $0x50] sm:$0xff] %v1226
        %1243 = vst [vmem:[%s437 + $0x58] sm:$0xff] %v1227
        %1244 = vst [vmem:[%s437 + $0x60] sm:$0xff] %v1228
        %1245 = vst [vmem:[%s437 + $0x68] sm:$0xff] %v1229
        %1246 = vst [vmem:[%s437 + $0x70] sm:$0xff] %v1230
        %1247 = vst [vmem:[%s437 + $0x78] sm:$0xff] %v1231
      $region60: #{forward.5} parent=51 // pred_fallthru
        _
      %s1248 = smul.u32 16, %s24
      %p1249 = scmp.lt.s32.totalorder %s1248, 15
      %s1250 = scalar_select %p1249, %s1248, 15
      %s1251 = smul.addr %s1250, 8
      %s1252 = scalar_lea.vmem %s8, %s1251
      // Predicated region
      $region61: #{forward.5} parent=51 // pred_check
        %p1253 = pneg %p253
      $region62: #{forward.5} parent=51 // pred_check_branch
        %1255 = sbr.rel (%p1253) target = $region64
      $region63: #{forward.5} parent=51 // pred_region
        %s1256 = smul.u32 16, %s24
      $region64: #{forward.5} parent=51 // pred_fallthru
        _
      // Predicated region
      $region65: #{forward.5} parent=51 // pred_check
        %p1257 = pneg %p253
      $region66: #{forward.5} parent=51 // pred_check_branch
        %1259 = sbr.rel (%p1257) target = $region68
      $region67: #{forward.5} parent=51 // pred_region
        %s1260 = smul.u32 16, %s24
        %p1261 = scmp.lt.s32.totalorder %s1260, 15
        %s1262 = scalar_select %p1261, %s1260, 15
        %s1263 = smul.addr %s1262, 8
        %s1264 = scalar_lea.vmem %s8, %s1263
      $region68: #{forward.5} parent=51 // pred_fallthru
        _
    $region52: #{forward.5} parent=5 // pred_fallthru
      _
    %p1265 = scmp.le.s32.totalorder 2, %s14
    // Predicated region
    $region69: #{forward.5} parent=5 // pred_check
      %p1266 = pneg %p1265
    $region70: #{forward.5} parent=5 // pred_check_branch
      %1268 = sbr.rel (%p1266) target = $region72
    $region71: #{forward.5} parent=5 // pred_region
      %s1269 = ssub.s32 %s14, 2
    $region72: #{forward.5} parent=5 // pred_fallthru
      _
  $region6: #{forward.5} parent=0 // loop_footer
    %s18 = sadd.s32 1, %s14
  $region7: #{forward.5} parent=0 // loop_footer_branch
    %13 = sbr.rel target = $region3
  $region8: #{forward.5} parent=0 // loop_exit
    _

</llo_original>
